<compile_context>
chip_gen: v6e
topology: v6e:2x2x1
jax: 0.10.0
libtpu: 0.0.40
codegen_flags: <defaults>
</compile_context>

<pallas_src>
import numpy as np
import jax
import jax.numpy as jnp
from jax.experimental import pallas as pl
from jax.experimental.pallas import tpu as pltpu  # noqa: F401  (used when scaling up)

# Small test configuration (module hyper-parameters).
B, N, D = 2, 8, 32          # batch, sequence length, model dim
H, DK, DV = 4, 16, 16       # heads, dim_key, dim_value
F = 8                       # num_rel_pos_features
HDK, HDV = H * DK, H * DV
R = B * N * N               # flattened (b, i, j) row space
SEG = 128                   # lane-aligned segment width in the fused QKV weight
SCALE = DK ** -0.5


def attention_kernel(x_ref, pos_ref, wqkv_ref, wrk_ref, rcb_ref, rpb_ref,
                     rep_ref, tile_ref, selt_ref, ehead_ref, eheadv_ref,
                     wout_ref, bout_ref, o_ref):
    # x_ref    : (B*N, D)        flattened tokens
    # pos_ref  : (R, F)          flattened relative-position features, r = b*N*N + i*N + j
    # wqkv_ref : (D, 3*SEG)      [Wq^T*scale | pad | Wk^T | pad | Wv^T | pad], 128-lane segments
    # wrk_ref  : (F, HDK)        W_rel_k^T
    # rcb_ref  : (1, HDK)        rel_content_bias flattened over (h, dk)
    # rpb_ref  : (1, HDK)        rel_pos_bias     flattened over (h, dk)
    # rep_ref  : (R, B*N)        0/1: row (b,i,j) <- token (b,i)
    # tile_ref : (R, B*N)        0/1: row (b,i,j) <- token (b,j)
    # selt_ref : (B*N, R)        0/1: sum over j   (= rep^T)
    # ehead_ref: (HDK, H)        0/1 block-diagonal head selector (sum_d within head)
    # eheadv_ref: (H, HDV)       0/1: replicate head weight across its DV lanes
    # wout_ref : (HDV, D)        Wout^T
    # bout_ref : (1, D)
    # o_ref    : (B*N, D)
    f32 = jnp.float32
    x2 = x_ref[...]

    # Fused Q/K/V projection: one MXU call; SCALE already folded into the Wq columns,
    # segments are lane-tile aligned so the slices below need no lane rotate.
    qkv = jnp.dot(x2, wqkv_ref[...], preferred_element_type=f32)       # (B*N, 3*SEG)
    q = qkv[:, 0:HDK]
    k = qkv[:, SEG:SEG + HDK]
    v = qkv[:, 2 * SEG:2 * SEG + HDV]

    # Relative-key projection for all (b, i, j) rows in one matmul.
    rel_k = jnp.dot(pos_ref[...], wrk_ref[...], preferred_element_type=f32)   # (R, HDK)

    # Expand q/k/v to the flat (b, i, j) row space with 0/1 selector matmuls
    # (exact copies, MXU data movement -> no broadcast/reshape relayouts).
    q_rep = jnp.dot(rep_ref[...], q, preferred_element_type=f32)       # (R, HDK)  q[b,i]
    k_rep = jnp.dot(tile_ref[...], k, preferred_element_type=f32)      # (R, HDK)  k[b,j]
    v_rep = jnp.dot(tile_ref[...], v, preferred_element_type=f32)      # (R, HDV)  v[b,j]

    # Content + relative logits for every (b, i, j, h) at once:
    # the DK contraction runs on the MXU via the block-diagonal head selector.
    pre = (q_rep + rcb_ref[...]) * k_rep + (q_rep + rpb_ref[...]) * rel_k     # (R, HDK)
    logits = jnp.dot(pre, ehead_ref[...], preferred_element_type=f32)          # (R, H)

    # Softmax over j for every (b, i, h) simultaneously.  j is the fast row index,
    # so view as (B*N, N, H) (layout-preserving reshape) and reduce over axis 1.
    l3 = logits.reshape(B * N, N, H)
    m = jnp.max(l3, axis=1, keepdims=True)
    e = jnp.exp(l3 - m)
    s = jnp.sum(e, axis=1, keepdims=True)
    attn = (e * pl.reciprocal(s, approx=True)).reshape(R, H)                   # (R, H)

    # attn @ v for all heads: replicate each head weight across its DV lanes (MXU),
    # multiply by v_rep (VPU), then collapse j with the transposed repeat selector (MXU).
    attn_exp = jnp.dot(attn, eheadv_ref[...], preferred_element_type=f32)      # (R, HDV)
    out_heads = jnp.dot(selt_ref[...], attn_exp * v_rep,
                        preferred_element_type=f32)                            # (B*N, HDV)

    # Output projection: one matmul for all batches & heads, then a single full store.
    out = jnp.dot(out_heads, wout_ref[...], preferred_element_type=f32) + bout_ref[...]
    o_ref[...] = out.astype(o_ref.dtype)


def _selector_constants():
    # 0/1 matrices so that data movement / head reduction run as exact MXU matmuls.
    rep = np.kron(np.eye(B * N), np.ones((N, 1))).astype(np.float32)             # (R, B*N)
    tile = np.kron(np.eye(B), np.tile(np.eye(N), (N, 1))).astype(np.float32)     # (R, B*N)
    selt = np.ascontiguousarray(rep.T)                                           # (B*N, R)
    e_head = np.kron(np.eye(H), np.ones((DK, 1))).astype(np.float32)             # (HDK, H)
    e_headv = np.kron(np.eye(H), np.ones((1, DV))).astype(np.float32)            # (H, HDV)
    return rep, tile, selt, e_head, e_headv


def attention_forward(x, positions, params):
    Bx, Nx, Dx = x.shape
    Fx = positions.shape[-1]
    assert (Bx, Nx, Dx, Fx) == (B, N, D, F)
    f32 = jnp.float32

    # Layout plumbing done wrapper-side (cheap XLA ops, keeps the kernel relayout-free).
    wqkv_t = jnp.zeros((D, 3 * SEG), f32)
    wqkv_t = wqkv_t.at[:, 0:HDK].set(params["wq"].T * SCALE)       # SCALE folded into Wq
    wqkv_t = wqkv_t.at[:, SEG:SEG + HDK].set(params["wk"].T)
    wqkv_t = wqkv_t.at[:, 2 * SEG:2 * SEG + HDV].set(params["wv"].T)

    wrk_t = params["wrk"].T                                         # (F, HDK)
    rcb = params["rcb"].reshape(1, HDK)
    rpb = params["rpb"].reshape(1, HDK)
    wout_t = params["wout"].T                                       # (HDV, D)
    bout = params["bout"].reshape(1, D)

    rep, tile, selt, e_head, e_headv = _selector_constants()

    out2 = pl.pallas_call(
        attention_kernel,
        out_shape=jax.ShapeDtypeStruct((B * N, D), x.dtype),
    )(x.reshape(B * N, D),
      positions.reshape(R, F),
      wqkv_t, wrk_t, rcb, rpb,
      jnp.asarray(rep), jnp.asarray(tile), jnp.asarray(selt),
      jnp.asarray(e_head), jnp.asarray(e_headv),
      wout_t, bout)
    return out2.reshape(B, N, D)


def attention_ref(x, positions, params):
    # Pure-JAX reference matching the PyTorch forward (dropout = identity).
    Bx, Nx, Dx = x.shape
    q = x @ params["wq"].T
    k = x @ params["wk"].T
    v = x @ params["wv"].T

    def heads(t, d):
        return t.reshape(Bx, Nx, H, d).transpose(0, 2, 1, 3)        # (B, H, N, d)

    q = heads(q, DK) * SCALE
    k = heads(k, DK)
    v = heads(v, DV)
    rcb = params["rcb"].reshape(1, H, 1, DK)
    rpb = params["rpb"].reshape(1, H, 1, DK)
    content = jnp.einsum("bhid,bhjd->bhij", q + rcb, k)
    rel_k = positions @ params["wrk"].T                              # (B, N, N, HDK)
    rel_k = rel_k.reshape(Bx, Nx, Nx, H, DK).transpose(0, 3, 1, 2, 4)
    rel = jnp.einsum("bhid,bhijd->bhij", q + rpb, rel_k)
    attn = jax.nn.softmax(content + rel, axis=-1)
    out = jnp.einsum("bhij,bhjd->bhid", attn, v)
    out = out.transpose(0, 2, 1, 3).reshape(Bx, Nx, H * DV)
    return out @ params["wout"].T + params["bout"]


if __name__ == "__main__":
    key = jax.random.PRNGKey(0)
    ks = jax.random.split(key, 10)
    s = 0.1
    params = {
        "wq": s * jax.random.normal(ks[0], (HDK, D), jnp.float32),
        "wk": s * jax.random.normal(ks[1], (HDK, D), jnp.float32),
        "wv": s * jax.random.normal(ks[2], (HDV, D), jnp.float32),
        "wrk": s * jax.random.normal(ks[3], (HDK, F), jnp.float32),
        "rcb": jax.random.normal(ks[4], (1, H, 1, DK), jnp.float32),
        "rpb": jax.random.normal(ks[5], (1, H, 1, DK), jnp.float32),
        # NOTE: the PyTorch module zero-inits to_out; random weights are used
        # here so the correctness check is non-trivial (forward math unchanged).
        "wout": s * jax.random.normal(ks[6], (D, HDV), jnp.float32),
        "bout": s * jax.random.normal(ks[7], (D,), jnp.float32),
    }
    x = jax.random.normal(ks[8], (B, N, D), jnp.float32)
    positions = jax.random.normal(ks[9], (B, N, N, F), jnp.float32)

    out = jax.block_until_ready(attention_forward(x, positions, params))
    ref = jax.block_until_ready(attention_ref(x, positions, params))

    assert out.shape == (B, N, D)
    err = float(jnp.max(jnp.abs(out - ref)))
    # Tolerance loosened slightly vs 1e-4 because of pl.reciprocal(approx=True).
    if not jnp.allclose(out, ref, atol=2e-3, rtol=2e-3):
        raise SystemExit(f"mismatch: max abs err = {err:e}")
    print("KERNEL_OK")
</pallas_src>

<mosaic_0001>
module attributes {stable_mosaic.version = 11 : i64} {
  func.func @attention_kernel(%arg0: memref<16x32xf32, #tpu.memory_space<vmem>>, %arg1: memref<128x8xf32, #tpu.memory_space<vmem>>, %arg2: memref<32x384xf32, #tpu.memory_space<vmem>>, %arg3: memref<8x64xf32, #tpu.memory_space<vmem>>, %arg4: memref<1x64xf32, #tpu.memory_space<vmem>>, %arg5: memref<1x64xf32, #tpu.memory_space<vmem>>, %arg6: memref<128x16xf32, #tpu.memory_space<vmem>>, %arg7: memref<128x16xf32, #tpu.memory_space<vmem>>, %arg8: memref<16x128xf32, #tpu.memory_space<vmem>>, %arg9: memref<64x4xf32, #tpu.memory_space<vmem>>, %arg10: memref<4x64xf32, #tpu.memory_space<vmem>>, %arg11: memref<64x32xf32, #tpu.memory_space<vmem>>, %arg12: memref<1x32xf32, #tpu.memory_space<vmem>>, %arg13: memref<16x32xf32, #tpu.memory_space<vmem>>) attributes {dimension_semantics = [], scalar_prefetch = 0 : i64, scratch_operands = 0 : i64, tpu.core_type = #tpu.core_type<tc>} {
    %c0 = arith.constant 0 : index
    %c0_0 = arith.constant 0 : index
    %0 = vector.load %arg0[%c0, %c0_0] : memref<16x32xf32, #tpu.memory_space<vmem>>, vector<16x32xf32>
    %c0_1 = arith.constant 0 : index
    %c0_2 = arith.constant 0 : index
    %1 = vector.load %arg2[%c0_1, %c0_2] : memref<32x384xf32, #tpu.memory_space<vmem>>, vector<32x384xf32>
    %cst = arith.constant dense<0.000000e+00> : vector<16x384xf32>
    %2 = tpu.matmul %0, %1, %cst {dimension_numbers = #tpu.dot_dimension_numbers<[1], [0], [0], [1], [0, 0, 1, 1], [], []>} : vector<16x32xf32>, vector<32x384xf32>, vector<16x384xf32> -> vector<16x384xf32>
    %3 = vector.extract_strided_slice %2 {offsets = [0, 0], sizes = [16, 64], strides = [1, 1]} : vector<16x384xf32> to vector<16x64xf32>
    %4 = vector.extract_strided_slice %2 {offsets = [0, 128], sizes = [16, 64], strides = [1, 1]} : vector<16x384xf32> to vector<16x64xf32>
    %5 = vector.extract_strided_slice %2 {offsets = [0, 256], sizes = [16, 64], strides = [1, 1]} : vector<16x384xf32> to vector<16x64xf32>
    %c0_3 = arith.constant 0 : index
    %c0_4 = arith.constant 0 : index
    %6 = vector.load %arg1[%c0_3, %c0_4] : memref<128x8xf32, #tpu.memory_space<vmem>>, vector<128x8xf32>
    %c0_5 = arith.constant 0 : index
    %c0_6 = arith.constant 0 : index
    %7 = vector.load %arg3[%c0_5, %c0_6] : memref<8x64xf32, #tpu.memory_space<vmem>>, vector<8x64xf32>
    %cst_7 = arith.constant dense<0.000000e+00> : vector<128x64xf32>
    %8 = tpu.matmul %6, %7, %cst_7 {dimension_numbers = #tpu.dot_dimension_numbers<[1], [0], [0], [1], [0, 0, 1, 1], [], []>} : vector<128x8xf32>, vector<8x64xf32>, vector<128x64xf32> -> vector<128x64xf32>
    %c0_8 = arith.constant 0 : index
    %c0_9 = arith.constant 0 : index
    %9 = vector.load %arg6[%c0_8, %c0_9] : memref<128x16xf32, #tpu.memory_space<vmem>>, vector<128x16xf32>
    %cst_10 = arith.constant dense<0.000000e+00> : vector<128x64xf32>
    %10 = tpu.matmul %9, %3, %cst_10 {dimension_numbers = #tpu.dot_dimension_numbers<[1], [0], [0], [1], [0, 0, 1, 1], [], []>} : vector<128x16xf32>, vector<16x64xf32>, vector<128x64xf32> -> vector<128x64xf32>
    %c0_11 = arith.constant 0 : index
    %c0_12 = arith.constant 0 : index
    %11 = vector.load %arg7[%c0_11, %c0_12] : memref<128x16xf32, #tpu.memory_space<vmem>>, vector<128x16xf32>
    %cst_13 = arith.constant dense<0.000000e+00> : vector<128x64xf32>
    %12 = tpu.matmul %11, %4, %cst_13 {dimension_numbers = #tpu.dot_dimension_numbers<[1], [0], [0], [1], [0, 0, 1, 1], [], []>} : vector<128x16xf32>, vector<16x64xf32>, vector<128x64xf32> -> vector<128x64xf32>
    %c0_14 = arith.constant 0 : index
    %c0_15 = arith.constant 0 : index
    %13 = vector.load %arg7[%c0_14, %c0_15] : memref<128x16xf32, #tpu.memory_space<vmem>>, vector<128x16xf32>
    %cst_16 = arith.constant dense<0.000000e+00> : vector<128x64xf32>
    %14 = tpu.matmul %13, %5, %cst_16 {dimension_numbers = #tpu.dot_dimension_numbers<[1], [0], [0], [1], [0, 0, 1, 1], [], []>} : vector<128x16xf32>, vector<16x64xf32>, vector<128x64xf32> -> vector<128x64xf32>
    %c0_17 = arith.constant 0 : index
    %c0_18 = arith.constant 0 : index
    %15 = vector.load %arg4[%c0_17, %c0_18] : memref<1x64xf32, #tpu.memory_space<vmem>>, vector<1x64xf32>
    %16 = vector.broadcast %15 : vector<1x64xf32> to vector<128x64xf32>
    %17 = arith.addf %10, %16 : vector<128x64xf32>
    %18 = arith.mulf %17, %12 : vector<128x64xf32>
    %c0_19 = arith.constant 0 : index
    %c0_20 = arith.constant 0 : index
    %19 = vector.load %arg5[%c0_19, %c0_20] : memref<1x64xf32, #tpu.memory_space<vmem>>, vector<1x64xf32>
    %20 = vector.broadcast %19 : vector<1x64xf32> to vector<128x64xf32>
    %21 = arith.addf %10, %20 : vector<128x64xf32>
    %22 = arith.mulf %21, %8 : vector<128x64xf32>
    %23 = arith.addf %18, %22 : vector<128x64xf32>
    %c0_21 = arith.constant 0 : index
    %c0_22 = arith.constant 0 : index
    %24 = vector.load %arg9[%c0_21, %c0_22] : memref<64x4xf32, #tpu.memory_space<vmem>>, vector<64x4xf32>
    %cst_23 = arith.constant dense<0.000000e+00> : vector<128x4xf32>
    %25 = tpu.matmul %23, %24, %cst_23 {dimension_numbers = #tpu.dot_dimension_numbers<[1], [0], [0], [1], [0, 0, 1, 1], [], []>} : vector<128x64xf32>, vector<64x4xf32>, vector<128x4xf32> -> vector<128x4xf32>
    %26 = vector.shape_cast %25 : vector<128x4xf32> to vector<16x8x4xf32>
    %cst_24 = arith.constant dense<0xFF800000> : vector<16x4xf32>
    %27 = vector.multi_reduction <maximumf>, %26, %cst_24 [1] : vector<16x8x4xf32> to vector<16x4xf32>
    %28 = vector.shape_cast %27 : vector<16x4xf32> to vector<16x1x4xf32>
    %29 = vector.broadcast %28 : vector<16x1x4xf32> to vector<16x8x4xf32>
    %30 = arith.subf %26, %29 : vector<16x8x4xf32>
    %31 = math.exp %30 : vector<16x8x4xf32>
    %cst_25 = arith.constant dense<0.000000e+00> : vector<16x4xf32>
    %32 = vector.multi_reduction <add>, %31, %cst_25 [1] : vector<16x8x4xf32> to vector<16x4xf32>
    %33 = vector.shape_cast %32 : vector<16x4xf32> to vector<16x1x4xf32>
    %34 = tpu.reciprocal %33 {approx = true} : vector<16x1x4xf32> -> vector<16x1x4xf32>
    %35 = vector.broadcast %34 : vector<16x1x4xf32> to vector<16x8x4xf32>
    %36 = arith.mulf %31, %35 : vector<16x8x4xf32>
    %37 = vector.shape_cast %36 : vector<16x8x4xf32> to vector<128x4xf32>
    %c0_26 = arith.constant 0 : index
    %c0_27 = arith.constant 0 : index
    %38 = vector.load %arg10[%c0_26, %c0_27] : memref<4x64xf32, #tpu.memory_space<vmem>>, vector<4x64xf32>
    %cst_28 = arith.constant dense<0.000000e+00> : vector<128x64xf32>
    %39 = tpu.matmul %37, %38, %cst_28 {dimension_numbers = #tpu.dot_dimension_numbers<[1], [0], [0], [1], [0, 0, 1, 1], [], []>} : vector<128x4xf32>, vector<4x64xf32>, vector<128x64xf32> -> vector<128x64xf32>
    %c0_29 = arith.constant 0 : index
    %c0_30 = arith.constant 0 : index
    %40 = vector.load %arg8[%c0_29, %c0_30] : memref<16x128xf32, #tpu.memory_space<vmem>>, vector<16x128xf32>
    %41 = arith.mulf %39, %14 : vector<128x64xf32>
    %cst_31 = arith.constant dense<0.000000e+00> : vector<16x64xf32>
    %42 = tpu.matmul %40, %41, %cst_31 {dimension_numbers = #tpu.dot_dimension_numbers<[1], [0], [0], [1], [0, 0, 1, 1], [], []>} : vector<16x128xf32>, vector<128x64xf32>, vector<16x64xf32> -> vector<16x64xf32>
    %c0_32 = arith.constant 0 : index
    %c0_33 = arith.constant 0 : index
    %43 = vector.load %arg11[%c0_32, %c0_33] : memref<64x32xf32, #tpu.memory_space<vmem>>, vector<64x32xf32>
    %cst_34 = arith.constant dense<0.000000e+00> : vector<16x32xf32>
    %44 = tpu.matmul %42, %43, %cst_34 {dimension_numbers = #tpu.dot_dimension_numbers<[1], [0], [0], [1], [0, 0, 1, 1], [], []>} : vector<16x64xf32>, vector<64x32xf32>, vector<16x32xf32> -> vector<16x32xf32>
    %c0_35 = arith.constant 0 : index
    %c0_36 = arith.constant 0 : index
    %45 = vector.load %arg12[%c0_35, %c0_36] : memref<1x32xf32, #tpu.memory_space<vmem>>, vector<1x32xf32>
    %46 = vector.broadcast %45 : vector<1x32xf32> to vector<16x32xf32>
    %47 = arith.addf %44, %46 : vector<16x32xf32>
    %c0_37 = arith.constant 0 : index
    %c0_38 = arith.constant 0 : index
    %48 = vector.load %arg13[%c0_37, %c0_38] : memref<16x32xf32, #tpu.memory_space<vmem>>, vector<16x32xf32>
    tpu.vector_store %arg13[%c0_37, %c0_38], %47 {strides = array<i32>} : memref<16x32xf32, #tpu.memory_space<vmem>>, vector<16x32xf32>,
    return
  }
}

</mosaic_0001>

<llo_original>
// kernel: tpu_custom_call.1
$region0: #{tpu_custom_call.1}
  #allocation0 [shape = 'u32[]', space=smem, size = 0x4, offset = 0x4, fixed_abs, tag = 'smem constant byte address 0x4 - core index']
  #allocation1 [shape = 'u32[144,128]{1,0:T(1,128)}', space=vmem, size = 0x12000, scoped, tag = 'internal scratch']
  %s0 = inlined_call_operand.vmem [shape: f32[16,32], index: 0, kind: input, shape index: {}]
  %s1 = inlined_call_operand.vmem [shape: f32[128,8], index: 1, kind: input, shape index: {}]
  %s2 = inlined_call_operand.vmem [shape: f32[32,384], index: 2, kind: input, shape index: {}]
  %s3 = inlined_call_operand.vmem [shape: f32[8,64], index: 3, kind: input, shape index: {}]
  %s4 = inlined_call_operand.vmem [shape: f32[1,64], index: 4, kind: input, shape index: {}]
  %s5 = inlined_call_operand.vmem [shape: f32[1,64], index: 5, kind: input, shape index: {}]
  %s6 = inlined_call_operand.vmem [shape: f32[128,16], index: 6, kind: input, shape index: {}]
  %s7 = inlined_call_operand.vmem [shape: f32[128,16], index: 7, kind: input, shape index: {}]
  %s8 = inlined_call_operand.vmem [shape: f32[16,128], index: 8, kind: input, shape index: {}]
  %s9 = inlined_call_operand.vmem [shape: f32[64,4], index: 9, kind: input, shape index: {}]
  %s10 = inlined_call_operand.vmem [shape: f32[4,64], index: 10, kind: input, shape index: {}]
  %s11 = inlined_call_operand.vmem [shape: f32[64,32], index: 11, kind: input, shape index: {}]
  %s12 = inlined_call_operand.vmem [shape: f32[1,32], index: 12, kind: input, shape index: {}]
  %s13 = inlined_call_operand.hbm [shape: f32[16,32], index: 13, kind: output, shape index: {}]
  %s14 = sld [smem:[#allocation0]]
  $region62: #{tpu_custom_call.1} parent=0
    _
  %s16 = ssub.s32 1, %s14
  %s17 = scalar_select 0, %s16, %s14
  $region1: #{tpu_custom_call.1} parent=0
    #allocation2 [shape = 'u8[8192]{0}', space=vmem, size = 0x2000, scoped, tag = 'output window, operand 0, single buffered']
    #allocation3 [shape = 's32[1]{0}', space=sflag, size = 0x4, scoped, tag = 'scoped memory for tpu_custom_call.1']
    %18 = vsyncpa [#allocation3], 0
    // Predicated region
    $region2: #{tpu_custom_call.1} parent=1 // pred_check
      _
    $region3: #{tpu_custom_call.1} parent=1 // pred_check_branch
      %20 = sbr.rel (0) target = $region5
    $region4: #{tpu_custom_call.1} parent=1 // pred_region
      _
    $region5: #{tpu_custom_call.1} parent=1 // pred_fallthru
      _
    // Predicated region
    $region6: #{tpu_custom_call.1} parent=1 // pred_check
      _
    $region7: #{tpu_custom_call.1} parent=1 // pred_check_branch
      %22 = sbr.rel (0) target = $region9
    $region8: #{tpu_custom_call.1} parent=1 // pred_region
      _
    $region9: #{tpu_custom_call.1} parent=1 // pred_fallthru
      _
    // Predicated region
    $region10: #{tpu_custom_call.1} parent=1 // pred_check
      _
    $region11: #{tpu_custom_call.1} parent=1 // pred_check_branch
      %24 = sbr.rel (0) target = $region13
    $region12: #{tpu_custom_call.1} parent=1 // pred_region
      _
    $region13: #{tpu_custom_call.1} parent=1 // pred_fallthru
      _
    // Predicated region
    $region14: #{tpu_custom_call.1} parent=1 // pred_check
      _
    $region15: #{tpu_custom_call.1} parent=1 // pred_check_branch
      %26 = sbr.rel (0) target = $region17
    $region16: #{tpu_custom_call.1} parent=1 // pred_region
      _
    $region17: #{tpu_custom_call.1} parent=1 // pred_fallthru
      _
    // Predicated region
    $region18: #{tpu_custom_call.1} parent=1 // pred_check
      _
    $region19: #{tpu_custom_call.1} parent=1 // pred_check_branch
      %28 = sbr.rel (0) target = $region21
    $region20: #{tpu_custom_call.1} parent=1 // pred_region
      _
    $region21: #{tpu_custom_call.1} parent=1 // pred_fallthru
      _
    // Predicated region
    $region22: #{tpu_custom_call.1} parent=1 // pred_check
      _
    $region23: #{tpu_custom_call.1} parent=1 // pred_check_branch
      %30 = sbr.rel (0) target = $region25
    $region24: #{tpu_custom_call.1} parent=1 // pred_region
      _
    $region25: #{tpu_custom_call.1} parent=1 // pred_fallthru
      _
    // Predicated region
    $region26: #{tpu_custom_call.1} parent=1 // pred_check
      _
    $region27: #{tpu_custom_call.1} parent=1 // pred_check_branch
      %32 = sbr.rel (0) target = $region29
    $region28: #{tpu_custom_call.1} parent=1 // pred_region
      _
    $region29: #{tpu_custom_call.1} parent=1 // pred_fallthru
      _
    // Predicated region
    $region30: #{tpu_custom_call.1} parent=1 // pred_check
      _
    $region31: #{tpu_custom_call.1} parent=1 // pred_check_branch
      %34 = sbr.rel (0) target = $region33
    $region32: #{tpu_custom_call.1} parent=1 // pred_region
      _
    $region33: #{tpu_custom_call.1} parent=1 // pred_fallthru
      _
    // Predicated region
    $region34: #{tpu_custom_call.1} parent=1 // pred_check
      _
    $region35: #{tpu_custom_call.1} parent=1 // pred_check_branch
      %36 = sbr.rel (0) target = $region37
    $region36: #{tpu_custom_call.1} parent=1 // pred_region
      _
    $region37: #{tpu_custom_call.1} parent=1 // pred_fallthru
      _
    // Predicated region
    $region38: #{tpu_custom_call.1} parent=1 // pred_check
      _
    $region39: #{tpu_custom_call.1} parent=1 // pred_check_branch
      %38 = sbr.rel (0) target = $region41
    $region40: #{tpu_custom_call.1} parent=1 // pred_region
      _
    $region41: #{tpu_custom_call.1} parent=1 // pred_fallthru
      _
    // Predicated region
    $region42: #{tpu_custom_call.1} parent=1 // pred_check
      _
    $region43: #{tpu_custom_call.1} parent=1 // pred_check_branch
      %40 = sbr.rel (0) target = $region45
    $region44: #{tpu_custom_call.1} parent=1 // pred_region
      _
    $region45: #{tpu_custom_call.1} parent=1 // pred_fallthru
      _
    // Predicated region
    $region46: #{tpu_custom_call.1} parent=1 // pred_check
      _
    $region47: #{tpu_custom_call.1} parent=1 // pred_check_branch
      %42 = sbr.rel (0) target = $region49
    $region48: #{tpu_custom_call.1} parent=1 // pred_region
      _
    $region49: #{tpu_custom_call.1} parent=1 // pred_fallthru
      _
    // Predicated region
    $region50: #{tpu_custom_call.1} parent=1 // pred_check
      _
    $region51: #{tpu_custom_call.1} parent=1 // pred_check_branch
      %44 = sbr.rel (0) target = $region53
    $region52: #{tpu_custom_call.1} parent=1 // pred_region
      _
    $region53: #{tpu_custom_call.1} parent=1 // pred_fallthru
      _
    %v45 = vld [vmem:[%s0] sm:$0xff]
    %v46 = vld [vmem:[%s0 + $0x8] sm:$0xff]
    %v47 = vld [vmem:[%s2] sm:$0xff]
    %v48 = vld [vmem:[%s2 + $0x8] sm:$0xff]
    %v49 = vld [vmem:[%s2 + $0x10] sm:$0xff]
    %v50 = vld [vmem:[%s2 + $0x18] sm:$0xff]
    %v51 = vld [vmem:[%s2 + $0x20] sm:$0xff]
    %v52 = vld [vmem:[%s2 + $0x28] sm:$0xff]
    %v53 = vld [vmem:[%s2 + $0x30] sm:$0xff]
    %v54 = vld [vmem:[%s2 + $0x38] sm:$0xff]
    %v55 = vld [vmem:[%s2 + $0x40] sm:$0xff]
    %v56 = vld [vmem:[%s2 + $0x48] sm:$0xff]
    %v57 = vld [vmem:[%s2 + $0x50] sm:$0xff]
    %v58 = vld [vmem:[%s2 + $0x58] sm:$0xff]
    %vm59 = vcmask 261120
    %v61 = vsel %vm59, %v45, 0
    %v64 = vsel %vm59, %v46, 0
    %66 = vmatprep.subr.mxu0 0.0
    %67 = vmatpush1.msra.mxu0 0.0
    %68 = vmatprep.subr.mxu0 0.0
    %69 = vmatpush1.msra.mxu0 0.0
    %70 = vmatprep.subr.mxu0 0.0
    %71 = vmatpush1.msra.mxu0 0.0
    %72 = vmatprep.subr.mxu0 0.0
    %73 = vmatpush1.msra.mxu0 0.0
    %74 = vmatprep.subr.mxu0 0.0
    %75 = vmatpush1.msra.mxu0 0.0
    %76 = vmatprep.subr.mxu0 0.0
    %77 = vmatpush1.msra.mxu0 0.0
    %78 = vmatprep.subr.mxu0 0.0
    %79 = vmatpush1.msra.mxu0 0.0
    %80 = vmatprep.subr.mxu0 0.0
    %81 = vmatpush1.msra.mxu0 0.0
    %82 = vmatprep.subr.mxu0 0.0
    %83 = vmatpush1.msra.mxu0 0.0
    %84 = vmatprep.subr.mxu0 0.0
    %85 = vmatpush1.msra.mxu0 0.0
    %86 = vmatprep.subr.mxu0 0.0
    %87 = vmatpush1.msra.mxu0 0.0
    %88 = vmatprep.subr.mxu0 0.0
    %89 = vmatpush1.msra.mxu0 0.0
    %90 = vmatprep.subr.mxu0 %v57
    %91 = vmatpush1.msra.mxu0 %v56
    %92 = vmatprep.subr.mxu0 %v54
    %93 = vmatpush1.msra.mxu0 %v53
    %94 = vmatprep.subr.mxu0 %v51
    %95 = vmatpush1.msra.mxu0 %v50
    %96 = vmatprep.subr.mxu0 %v48
    %97 = vmatpush1.msra.mxu0 %v47
    %98 = vmatprep.subr.mxu0 0.0
    %99 = vmatpush2.msra.mxu0 0.0
    %100 = vmatprep.subr.mxu0 0.0
    %101 = vmatpush2.msra.mxu0 0.0
    %102 = vmatprep.subr.mxu0 0.0
    %103 = vmatpush2.msra.mxu0 0.0
    %104 = vmatprep.subr.mxu0 0.0
    %105 = vmatpush2.msra.mxu0 0.0
    %106 = vmatprep.subr.mxu0 0.0
    %107 = vmatpush2.msra.mxu0 0.0
    %108 = vmatprep.subr.mxu0 0.0
    %109 = vmatpush2.msra.mxu0 0.0
    %110 = vmatprep.subr.mxu0 0.0
    %111 = vmatpush2.msra.mxu0 0.0
    %112 = vmatprep.subr.mxu0 0.0
    %113 = vmatpush2.msra.mxu0 0.0
    %114 = vmatprep.subr.mxu0 0.0
    %115 = vmatpush2.msra.mxu0 0.0
    %116 = vmatprep.subr.mxu0 0.0
    %117 = vmatpush2.msra.mxu0 0.0
    %118 = vmatprep.subr.mxu0 0.0
    %119 = vmatpush2.msra.mxu0 0.0
    %120 = vmatprep.subr.mxu0 0.0
    %121 = vmatpush2.msra.mxu0 0.0
    %122 = vmatprep.subr.mxu0 0.0
    %123 = vmatpush2.msra.mxu0 0.0
    %124 = vmatprep.subr.mxu0 0.0
    %125 = vmatpush2.msra.mxu0 0.0
    %126 = vmatprep.subr.mxu0 0.0
    %127 = vmatpush2.msra.mxu0 0.0
    %128 = vmatprep.subr.mxu0 0.0
    %129 = vmatpush2.msra.mxu0 0.0
    %130 = vmatprep.mubr.f32.mxu0 0.0
    %131 = vmatmul.mubr.f32.gmra.mxu0 %v61
    %v132 = vpop.f32.mrf.mxu0
    %v133 = vadd.f32 0.0, %v132
    %v134 = vpop.f32.mrf.mxu0
    %v135 = vadd.f32 0.0, %v134
    %136 = vmatprep.mubr.f32.mxu0 0.0
    %137 = vmatmul.mubr.f32.gmra.mxu0 %v64
    %v138 = vpop.f32.mrf.mxu0
    %v139 = vadd.f32 0.0, %v138
    %v140 = vpop.f32.mrf.mxu0
    %v141 = vadd.f32 0.0, %v140
    %142 = vdwg.mxu0
    %143 = vmatprep.subr.mxu0 0.0
    %144 = vmatpush1.msra.mxu0 0.0
    %145 = vmatprep.subr.mxu0 0.0
    %146 = vmatpush1.msra.mxu0 0.0
    %147 = vmatprep.subr.mxu0 0.0
    %148 = vmatpush1.msra.mxu0 0.0
    %149 = vmatprep.subr.mxu0 0.0
    %150 = vmatpush1.msra.mxu0 0.0
    %151 = vmatprep.subr.mxu0 0.0
    %152 = vmatpush1.msra.mxu0 0.0
    %153 = vmatprep.subr.mxu0 0.0
    %154 = vmatpush1.msra.mxu0 0.0
    %155 = vmatprep.subr.mxu0 0.0
    %156 = vmatpush1.msra.mxu0 0.0
    %157 = vmatprep.subr.mxu0 0.0
    %158 = vmatpush1.msra.mxu0 0.0
    %159 = vmatprep.subr.mxu0 0.0
    %160 = vmatpush1.msra.mxu0 0.0
    %161 = vmatprep.subr.mxu0 0.0
    %162 = vmatpush1.msra.mxu0 0.0
    %163 = vmatprep.subr.mxu0 0.0
    %164 = vmatpush1.msra.mxu0 0.0
    %165 = vmatprep.subr.mxu0 0.0
    %166 = vmatpush1.msra.mxu0 0.0
    %167 = vmatprep.subr.mxu0 0.0
    %168 = vmatpush1.msra.mxu0 %v58
    %169 = vmatprep.subr.mxu0 0.0
    %170 = vmatpush1.msra.mxu0 %v55
    %171 = vmatprep.subr.mxu0 0.0
    %172 = vmatpush1.msra.mxu0 %v52
    %173 = vmatprep.subr.mxu0 0.0
    %174 = vmatpush1.msra.mxu0 %v49
    %175 = vmatprep.subr.mxu0 0.0
    %176 = vmatpush2.msra.mxu0 0.0
    %177 = vmatprep.subr.mxu0 0.0
    %178 = vmatpush2.msra.mxu0 0.0
    %179 = vmatprep.subr.mxu0 0.0
    %180 = vmatpush2.msra.mxu0 0.0
    %181 = vmatprep.subr.mxu0 0.0
    %182 = vmatpush2.msra.mxu0 0.0
    %183 = vmatprep.subr.mxu0 0.0
    %184 = vmatpush2.msra.mxu0 0.0
    %185 = vmatprep.subr.mxu0 0.0
    %186 = vmatpush2.msra.mxu0 0.0
    %187 = vmatprep.subr.mxu0 0.0
    %188 = vmatpush2.msra.mxu0 0.0
    %189 = vmatprep.subr.mxu0 0.0
    %190 = vmatpush2.msra.mxu0 0.0
    %191 = vmatprep.subr.mxu0 0.0
    %192 = vmatpush2.msra.mxu0 0.0
    %193 = vmatprep.subr.mxu0 0.0
    %194 = vmatpush2.msra.mxu0 0.0
    %195 = vmatprep.subr.mxu0 0.0
    %196 = vmatpush2.msra.mxu0 0.0
    %197 = vmatprep.subr.mxu0 0.0
    %198 = vmatpush2.msra.mxu0 0.0
    %199 = vmatprep.subr.mxu0 0.0
    %200 = vmatpush2.msra.mxu0 0.0
    %201 = vmatprep.subr.mxu0 0.0
    %202 = vmatpush2.msra.mxu0 0.0
    %203 = vmatprep.subr.mxu0 0.0
    %204 = vmatpush2.msra.mxu0 0.0
    %205 = vmatprep.subr.mxu0 0.0
    %206 = vmatpush2.msra.mxu0 0.0
    %207 = vmatprep.mubr.f32.mxu0 0.0
    %208 = vmatmul.mubr.f32.gmra.mxu0 %v61
    %v209 = vpop.f32.mrf.mxu0
    %v210 = vadd.f32 0.0, %v209
    %v211 = vpop.f32.mrf.mxu0
    %212 = vmatprep.mubr.f32.mxu0 0.0
    %213 = vmatmul.mubr.f32.gmra.mxu0 %v64
    %v214 = vpop.f32.mrf.mxu0
    %v215 = vadd.f32 0.0, %v214
    %v216 = vpop.f32.mrf.mxu0
    %217 = vdwg.mxu0
    %v218 = vld [vmem:[%s1] sm:$0xff]
    %v219 = vld [vmem:[%s1 + $0x8] sm:$0xff]
    %v220 = vld [vmem:[%s1 + $0x10] sm:$0xff]
    %v221 = vld [vmem:[%s1 + $0x18] sm:$0xff]
    %v222 = vld [vmem:[%s1 + $0x20] sm:$0xff]
    %v223 = vld [vmem:[%s1 + $0x28] sm:$0xff]
    %v224 = vld [vmem:[%s1 + $0x30] sm:$0xff]
    %v225 = vld [vmem:[%s1 + $0x38] sm:$0xff]
    %v226 = vld [vmem:[%s1 + $0x40] sm:$0xff]
    %v227 = vld [vmem:[%s1 + $0x48] sm:$0xff]
    %v228 = vld [vmem:[%s1 + $0x50] sm:$0xff]
    %v229 = vld [vmem:[%s1 + $0x58] sm:$0xff]
    %v230 = vld [vmem:[%s1 + $0x60] sm:$0xff]
    %v231 = vld [vmem:[%s1 + $0x68] sm:$0xff]
    %v232 = vld [vmem:[%s1 + $0x70] sm:$0xff]
    %v233 = vld [vmem:[%s1 + $0x78] sm:$0xff]
    %v234 = vld [vmem:[%s3] sm:$0xff]
    %vm235 = vcmask 64512
    %v237 = vsel %vm235, %v218, 0
    %v240 = vsel %vm235, %v219, 0
    %v243 = vsel %vm235, %v220, 0
    %v246 = vsel %vm235, %v221, 0
    %v249 = vsel %vm235, %v222, 0
    %v252 = vsel %vm235, %v223, 0
    %v255 = vsel %vm235, %v224, 0
    %v258 = vsel %vm235, %v225, 0
    %v261 = vsel %vm235, %v226, 0
    %v264 = vsel %vm235, %v227, 0
    %v267 = vsel %vm235, %v228, 0
    %v270 = vsel %vm235, %v229, 0
    %v273 = vsel %vm235, %v230, 0
    %v276 = vsel %vm235, %v231, 0
    %v279 = vsel %vm235, %v232, 0
    %v282 = vsel %vm235, %v233, 0
    %284 = vmatprep.subr.mxu0 0.0
    %285 = vmatpush1.msra.mxu0 0.0
    %286 = vmatprep.subr.mxu0 0.0
    %287 = vmatpush1.msra.mxu0 0.0
    %288 = vmatprep.subr.mxu0 0.0
    %289 = vmatpush1.msra.mxu0 0.0
    %290 = vmatprep.subr.mxu0 0.0
    %291 = vmatpush1.msra.mxu0 0.0
    %292 = vmatprep.subr.mxu0 0.0
    %293 = vmatpush1.msra.mxu0 0.0
    %294 = vmatprep.subr.mxu0 0.0
    %295 = vmatpush1.msra.mxu0 0.0
    %296 = vmatprep.subr.mxu0 0.0
    %297 = vmatpush1.msra.mxu0 0.0
    %298 = vmatprep.subr.mxu0 0.0
    %299 = vmatpush1.msra.mxu0 0.0
    %300 = vmatprep.subr.mxu0 0.0
    %301 = vmatpush1.msra.mxu0 0.0
    %302 = vmatprep.subr.mxu0 0.0
    %303 = vmatpush1.msra.mxu0 0.0
    %304 = vmatprep.subr.mxu0 0.0
    %305 = vmatpush1.msra.mxu0 0.0
    %306 = vmatprep.subr.mxu0 0.0
    %307 = vmatpush1.msra.mxu0 0.0
    %308 = vmatprep.subr.mxu0 0.0
    %309 = vmatpush1.msra.mxu0 0.0
    %310 = vmatprep.subr.mxu0 0.0
    %311 = vmatpush1.msra.mxu0 0.0
    %312 = vmatprep.subr.mxu0 0.0
    %313 = vmatpush1.msra.mxu0 0.0
    %314 = vmatprep.subr.mxu0 0.0
    %315 = vmatpush1.msra.mxu0 %v234
    %316 = vmatprep.subr.mxu0 0.0
    %317 = vmatpush2.msra.mxu0 0.0
    %318 = vmatprep.subr.mxu0 0.0
    %319 = vmatpush2.msra.mxu0 0.0
    %320 = vmatprep.subr.mxu0 0.0
    %321 = vmatpush2.msra.mxu0 0.0
    %322 = vmatprep.subr.mxu0 0.0
    %323 = vmatpush2.msra.mxu0 0.0
    %324 = vmatprep.subr.mxu0 0.0
    %325 = vmatpush2.msra.mxu0 0.0
    %326 = vmatprep.subr.mxu0 0.0
    %327 = vmatpush2.msra.mxu0 0.0
    %328 = vmatprep.subr.mxu0 0.0
    %329 = vmatpush2.msra.mxu0 0.0
    %330 = vmatprep.subr.mxu0 0.0
    %331 = vmatpush2.msra.mxu0 0.0
    %332 = vmatprep.subr.mxu0 0.0
    %333 = vmatpush2.msra.mxu0 0.0
    %334 = vmatprep.subr.mxu0 0.0
    %335 = vmatpush2.msra.mxu0 0.0
    %336 = vmatprep.subr.mxu0 0.0
    %337 = vmatpush2.msra.mxu0 0.0
    %338 = vmatprep.subr.mxu0 0.0
    %339 = vmatpush2.msra.mxu0 0.0
    %340 = vmatprep.subr.mxu0 0.0
    %341 = vmatpush2.msra.mxu0 0.0
    %342 = vmatprep.subr.mxu0 0.0
    %343 = vmatpush2.msra.mxu0 0.0
    %344 = vmatprep.subr.mxu0 0.0
    %345 = vmatpush2.msra.mxu0 0.0
    %346 = vmatprep.subr.mxu0 0.0
    %347 = vmatpush2.msra.mxu0 0.0
    %348 = vmatprep.mubr.f32.mxu0 0.0
    %349 = vmatmul.mubr.f32.gmra.mxu0 %v237
    %v350 = vpop.f32.mrf.mxu0
    %v351 = vadd.f32 0.0, %v350
    %v352 = vpop.f32.mrf.mxu0
    %353 = vmatprep.mubr.f32.mxu0 0.0
    %354 = vmatmul.mubr.f32.gmra.mxu0 %v240
    %v355 = vpop.f32.mrf.mxu0
    %v356 = vadd.f32 0.0, %v355
    %v357 = vpop.f32.mrf.mxu0
    %358 = vmatprep.mubr.f32.mxu0 0.0
    %359 = vmatmul.mubr.f32.gmra.mxu0 %v243
    %v360 = vpop.f32.mrf.mxu0
    %v361 = vadd.f32 0.0, %v360
    %v362 = vpop.f32.mrf.mxu0
    %363 = vmatprep.mubr.f32.mxu0 0.0
    %364 = vmatmul.mubr.f32.gmra.mxu0 %v246
    %v365 = vpop.f32.mrf.mxu0
    %v366 = vadd.f32 0.0, %v365
    %v367 = vpop.f32.mrf.mxu0
    %368 = vmatprep.mubr.f32.mxu0 0.0
    %369 = vmatmul.mubr.f32.gmra.mxu0 %v249
    %v370 = vpop.f32.mrf.mxu0
    %v371 = vadd.f32 0.0, %v370
    %v372 = vpop.f32.mrf.mxu0
    %373 = vmatprep.mubr.f32.mxu0 0.0
    %374 = vmatmul.mubr.f32.gmra.mxu0 %v252
    %v375 = vpop.f32.mrf.mxu0
    %v376 = vadd.f32 0.0, %v375
    %v377 = vpop.f32.mrf.mxu0
    %378 = vmatprep.mubr.f32.mxu0 0.0
    %379 = vmatmul.mubr.f32.gmra.mxu0 %v255
    %v380 = vpop.f32.mrf.mxu0
    %v381 = vadd.f32 0.0, %v380
    %v382 = vpop.f32.mrf.mxu0
    %383 = vmatprep.mubr.f32.mxu0 0.0
    %384 = vmatmul.mubr.f32.gmra.mxu0 %v258
    %v385 = vpop.f32.mrf.mxu0
    %v386 = vadd.f32 0.0, %v385
    %v387 = vpop.f32.mrf.mxu0
    %388 = vmatprep.mubr.f32.mxu0 0.0
    %389 = vmatmul.mubr.f32.gmra.mxu0 %v261
    %v390 = vpop.f32.mrf.mxu0
    %v391 = vadd.f32 0.0, %v390
    %v392 = vpop.f32.mrf.mxu0
    %393 = vmatprep.mubr.f32.mxu0 0.0
    %394 = vmatmul.mubr.f32.gmra.mxu0 %v264
    %v395 = vpop.f32.mrf.mxu0
    %v396 = vadd.f32 0.0, %v395
    %v397 = vpop.f32.mrf.mxu0
    %398 = vmatprep.mubr.f32.mxu0 0.0
    %399 = vmatmul.mubr.f32.gmra.mxu0 %v267
    %v400 = vpop.f32.mrf.mxu0
    %v401 = vadd.f32 0.0, %v400
    %v402 = vpop.f32.mrf.mxu0
    %403 = vmatprep.mubr.f32.mxu0 0.0
    %404 = vmatmul.mubr.f32.gmra.mxu0 %v270
    %v405 = vpop.f32.mrf.mxu0
    %v406 = vadd.f32 0.0, %v405
    %v407 = vpop.f32.mrf.mxu0
    %408 = vmatprep.mubr.f32.mxu0 0.0
    %409 = vmatmul.mubr.f32.gmra.mxu0 %v273
    %v410 = vpop.f32.mrf.mxu0
    %v411 = vadd.f32 0.0, %v410
    %v412 = vpop.f32.mrf.mxu0
    %413 = vmatprep.mubr.f32.mxu0 0.0
    %414 = vmatmul.mubr.f32.gmra.mxu0 %v276
    %v415 = vpop.f32.mrf.mxu0
    %v416 = vadd.f32 0.0, %v415
    %v417 = vpop.f32.mrf.mxu0
    %418 = vmatprep.mubr.f32.mxu0 0.0
    %419 = vmatmul.mubr.f32.gmra.mxu0 %v279
    %v420 = vpop.f32.mrf.mxu0
    %v421 = vadd.f32 0.0, %v420
    %v422 = vpop.f32.mrf.mxu0
    %423 = vmatprep.mubr.f32.mxu0 0.0
    %424 = vmatmul.mubr.f32.gmra.mxu0 %v282
    %v425 = vpop.f32.mrf.mxu0
    %v426 = vadd.f32 0.0, %v425
    %v427 = vpop.f32.mrf.mxu0
    %428 = vdwg.mxu0
    %v429 = vld [vmem:[%s6] sm:$0xff]
    %v430 = vld [vmem:[%s6 + $0x8] sm:$0xff]
    %v431 = vld [vmem:[%s6 + $0x10] sm:$0xff]
    %v432 = vld [vmem:[%s6 + $0x18] sm:$0xff]
    %v433 = vld [vmem:[%s6 + $0x20] sm:$0xff]
    %v434 = vld [vmem:[%s6 + $0x28] sm:$0xff]
    %v435 = vld [vmem:[%s6 + $0x30] sm:$0xff]
    %v436 = vld [vmem:[%s6 + $0x38] sm:$0xff]
    %v437 = vld [vmem:[%s6 + $0x40] sm:$0xff]
    %v438 = vld [vmem:[%s6 + $0x48] sm:$0xff]
    %v439 = vld [vmem:[%s6 + $0x50] sm:$0xff]
    %v440 = vld [vmem:[%s6 + $0x58] sm:$0xff]
    %v441 = vld [vmem:[%s6 + $0x60] sm:$0xff]
    %v442 = vld [vmem:[%s6 + $0x68] sm:$0xff]
    %v443 = vld [vmem:[%s6 + $0x70] sm:$0xff]
    %v444 = vld [vmem:[%s6 + $0x78] sm:$0xff]
    %vm445 = vcmask 130048
    %v447 = vsel %vm445, %v429, 0
    %v450 = vsel %vm445, %v430, 0
    %v453 = vsel %vm445, %v431, 0
    %v456 = vsel %vm445, %v432, 0
    %v459 = vsel %vm445, %v433, 0
    %v462 = vsel %vm445, %v434, 0
    %v465 = vsel %vm445, %v435, 0
    %v468 = vsel %vm445, %v436, 0
    %v471 = vsel %vm445, %v437, 0
    %v474 = vsel %vm445, %v438, 0
    %v477 = vsel %vm445, %v439, 0
    %v480 = vsel %vm445, %v440, 0
    %v483 = vsel %vm445, %v441, 0
    %v486 = vsel %vm445, %v442, 0
    %v489 = vsel %vm445, %v443, 0
    %v492 = vsel %vm445, %v444, 0
    %494 = vmatprep.subr.mxu0 0.0
    %495 = vmatpush1.msra.mxu0 0.0
    %496 = vmatprep.subr.mxu0 0.0
    %497 = vmatpush1.msra.mxu0 0.0
    %498 = vmatprep.subr.mxu0 0.0
    %499 = vmatpush1.msra.mxu0 0.0
    %500 = vmatprep.subr.mxu0 0.0
    %501 = vmatpush1.msra.mxu0 0.0
    %502 = vmatprep.subr.mxu0 0.0
    %503 = vmatpush1.msra.mxu0 0.0
    %504 = vmatprep.subr.mxu0 0.0
    %505 = vmatpush1.msra.mxu0 0.0
    %506 = vmatprep.subr.mxu0 0.0
    %507 = vmatpush1.msra.mxu0 0.0
    %508 = vmatprep.subr.mxu0 0.0
    %509 = vmatpush1.msra.mxu0 0.0
    %510 = vmatprep.subr.mxu0 0.0
    %511 = vmatpush1.msra.mxu0 0.0
    %512 = vmatprep.subr.mxu0 0.0
    %513 = vmatpush1.msra.mxu0 0.0
    %514 = vmatprep.subr.mxu0 0.0
    %515 = vmatpush1.msra.mxu0 0.0
    %516 = vmatprep.subr.mxu0 0.0
    %517 = vmatpush1.msra.mxu0 0.0
    %518 = vmatprep.subr.mxu0 0.0
    %519 = vmatpush1.msra.mxu0 0.0
    %520 = vmatprep.subr.mxu0 0.0
    %521 = vmatpush1.msra.mxu0 0.0
    %522 = vmatprep.subr.mxu0 0.0
    %523 = vmatpush1.msra.mxu0 %v139
    %524 = vmatprep.subr.mxu0 0.0
    %525 = vmatpush1.msra.mxu0 %v133
    %526 = vmatprep.subr.mxu0 0.0
    %527 = vmatpush2.msra.mxu0 0.0
    %528 = vmatprep.subr.mxu0 0.0
    %529 = vmatpush2.msra.mxu0 0.0
    %530 = vmatprep.subr.mxu0 0.0
    %531 = vmatpush2.msra.mxu0 0.0
    %532 = vmatprep.subr.mxu0 0.0
    %533 = vmatpush2.msra.mxu0 0.0
    %534 = vmatprep.subr.mxu0 0.0
    %535 = vmatpush2.msra.mxu0 0.0
    %536 = vmatprep.subr.mxu0 0.0
    %537 = vmatpush2.msra.mxu0 0.0
    %538 = vmatprep.subr.mxu0 0.0
    %539 = vmatpush2.msra.mxu0 0.0
    %540 = vmatprep.subr.mxu0 0.0
    %541 = vmatpush2.msra.mxu0 0.0
    %542 = vmatprep.subr.mxu0 0.0
    %543 = vmatpush2.msra.mxu0 0.0
    %544 = vmatprep.subr.mxu0 0.0
    %545 = vmatpush2.msra.mxu0 0.0
    %546 = vmatprep.subr.mxu0 0.0
    %547 = vmatpush2.msra.mxu0 0.0
    %548 = vmatprep.subr.mxu0 0.0
    %549 = vmatpush2.msra.mxu0 0.0
    %550 = vmatprep.subr.mxu0 0.0
    %551 = vmatpush2.msra.mxu0 0.0
    %552 = vmatprep.subr.mxu0 0.0
    %553 = vmatpush2.msra.mxu0 0.0
    %554 = vmatprep.subr.mxu0 0.0
    %555 = vmatpush2.msra.mxu0 0.0
    %556 = vmatprep.subr.mxu0 0.0
    %557 = vmatpush2.msra.mxu0 0.0
    %558 = vmatprep.mubr.f32.mxu0 0.0
    %559 = vmatmul.mubr.f32.gmra.mxu0 %v447
    %v560 = vpop.f32.mrf.mxu0
    %v561 = vadd.f32 0.0, %v560
    %v562 = vpop.f32.mrf.mxu0
    %563 = vmatprep.mubr.f32.mxu0 0.0
    %564 = vmatmul.mubr.f32.gmra.mxu0 %v450
    %v565 = vpop.f32.mrf.mxu0
    %v566 = vadd.f32 0.0, %v565
    %v567 = vpop.f32.mrf.mxu0
    %568 = vmatprep.mubr.f32.mxu0 0.0
    %569 = vmatmul.mubr.f32.gmra.mxu0 %v453
    %v570 = vpop.f32.mrf.mxu0
    %v571 = vadd.f32 0.0, %v570
    %v572 = vpop.f32.mrf.mxu0
    %573 = vmatprep.mubr.f32.mxu0 0.0
    %574 = vmatmul.mubr.f32.gmra.mxu0 %v456
    %v575 = vpop.f32.mrf.mxu0
    %v576 = vadd.f32 0.0, %v575
    %v577 = vpop.f32.mrf.mxu0
    %578 = vmatprep.mubr.f32.mxu0 0.0
    %579 = vmatmul.mubr.f32.gmra.mxu0 %v459
    %v580 = vpop.f32.mrf.mxu0
    %v581 = vadd.f32 0.0, %v580
    %v582 = vpop.f32.mrf.mxu0
    %583 = vmatprep.mubr.f32.mxu0 0.0
    %584 = vmatmul.mubr.f32.gmra.mxu0 %v462
    %v585 = vpop.f32.mrf.mxu0
    %v586 = vadd.f32 0.0, %v585
    %v587 = vpop.f32.mrf.mxu0
    %588 = vmatprep.mubr.f32.mxu0 0.0
    %589 = vmatmul.mubr.f32.gmra.mxu0 %v465
    %v590 = vpop.f32.mrf.mxu0
    %v591 = vadd.f32 0.0, %v590
    %v592 = vpop.f32.mrf.mxu0
    %593 = vmatprep.mubr.f32.mxu0 0.0
    %594 = vmatmul.mubr.f32.gmra.mxu0 %v468
    %v595 = vpop.f32.mrf.mxu0
    %v596 = vadd.f32 0.0, %v595
    %v597 = vpop.f32.mrf.mxu0
    %598 = vmatprep.mubr.f32.mxu0 0.0
    %599 = vmatmul.mubr.f32.gmra.mxu0 %v471
    %v600 = vpop.f32.mrf.mxu0
    %v601 = vadd.f32 0.0, %v600
    %v602 = vpop.f32.mrf.mxu0
    %603 = vmatprep.mubr.f32.mxu0 0.0
    %604 = vmatmul.mubr.f32.gmra.mxu0 %v474
    %v605 = vpop.f32.mrf.mxu0
    %v606 = vadd.f32 0.0, %v605
    %v607 = vpop.f32.mrf.mxu0
    %608 = vmatprep.mubr.f32.mxu0 0.0
    %609 = vmatmul.mubr.f32.gmra.mxu0 %v477
    %v610 = vpop.f32.mrf.mxu0
    %v611 = vadd.f32 0.0, %v610
    %v612 = vpop.f32.mrf.mxu0
    %613 = vmatprep.mubr.f32.mxu0 0.0
    %614 = vmatmul.mubr.f32.gmra.mxu0 %v480
    %v615 = vpop.f32.mrf.mxu0
    %v616 = vadd.f32 0.0, %v615
    %v617 = vpop.f32.mrf.mxu0
    %618 = vmatprep.mubr.f32.mxu0 0.0
    %619 = vmatmul.mubr.f32.gmra.mxu0 %v483
    %v620 = vpop.f32.mrf.mxu0
    %v621 = vadd.f32 0.0, %v620
    %v622 = vpop.f32.mrf.mxu0
    %623 = vmatprep.mubr.f32.mxu0 0.0
    %624 = vmatmul.mubr.f32.gmra.mxu0 %v486
    %v625 = vpop.f32.mrf.mxu0
    %v626 = vadd.f32 0.0, %v625
    %v627 = vpop.f32.mrf.mxu0
    %628 = vmatprep.mubr.f32.mxu0 0.0
    %629 = vmatmul.mubr.f32.gmra.mxu0 %v489
    %v630 = vpop.f32.mrf.mxu0
    %v631 = vadd.f32 0.0, %v630
    %v632 = vpop.f32.mrf.mxu0
    %633 = vmatprep.mubr.f32.mxu0 0.0
    %634 = vmatmul.mubr.f32.gmra.mxu0 %v492
    %v635 = vpop.f32.mrf.mxu0
    %v636 = vadd.f32 0.0, %v635
    %v637 = vpop.f32.mrf.mxu0
    %638 = vdwg.mxu0
    %v639 = vld [vmem:[%s7] sm:$0xff]
    %v640 = vld [vmem:[%s7 + $0x8] sm:$0xff]
    %v641 = vld [vmem:[%s7 + $0x10] sm:$0xff]
    %v642 = vld [vmem:[%s7 + $0x18] sm:$0xff]
    %v643 = vld [vmem:[%s7 + $0x20] sm:$0xff]
    %v644 = vld [vmem:[%s7 + $0x28] sm:$0xff]
    %v645 = vld [vmem:[%s7 + $0x30] sm:$0xff]
    %v646 = vld [vmem:[%s7 + $0x38] sm:$0xff]
    %v647 = vld [vmem:[%s7 + $0x40] sm:$0xff]
    %v648 = vld [vmem:[%s7 + $0x48] sm:$0xff]
    %v649 = vld [vmem:[%s7 + $0x50] sm:$0xff]
    %v650 = vld [vmem:[%s7 + $0x58] sm:$0xff]
    %v651 = vld [vmem:[%s7 + $0x60] sm:$0xff]
    %v652 = vld [vmem:[%s7 + $0x68] sm:$0xff]
    %v653 = vld [vmem:[%s7 + $0x70] sm:$0xff]
    %v654 = vld [vmem:[%s7 + $0x78] sm:$0xff]
    %v656 = vsel %vm445, %v639, 0
    %v659 = vsel %vm445, %v640, 0
    %v662 = vsel %vm445, %v641, 0
    %v665 = vsel %vm445, %v642, 0
    %v668 = vsel %vm445, %v643, 0
    %v671 = vsel %vm445, %v644, 0
    %v674 = vsel %vm445, %v645, 0
    %v677 = vsel %vm445, %v646, 0
    %v680 = vsel %vm445, %v647, 0
    %v683 = vsel %vm445, %v648, 0
    %v686 = vsel %vm445, %v649, 0
    %v689 = vsel %vm445, %v650, 0
    %v692 = vsel %vm445, %v651, 0
    %v695 = vsel %vm445, %v652, 0
    %v698 = vsel %vm445, %v653, 0
    %v701 = vsel %vm445, %v654, 0
    %703 = vmatprep.subr.mxu0 0.0
    %704 = vmatpush1.msra.mxu0 0.0
    %705 = vmatprep.subr.mxu0 0.0
    %706 = vmatpush1.msra.mxu0 0.0
    %707 = vmatprep.subr.mxu0 0.0
    %708 = vmatpush1.msra.mxu0 0.0
    %709 = vmatprep.subr.mxu0 0.0
    %710 = vmatpush1.msra.mxu0 0.0
    %711 = vmatprep.subr.mxu0 0.0
    %712 = vmatpush1.msra.mxu0 0.0
    %713 = vmatprep.subr.mxu0 0.0
    %714 = vmatpush1.msra.mxu0 0.0
    %715 = vmatprep.subr.mxu0 0.0
    %716 = vmatpush1.msra.mxu0 0.0
    %717 = vmatprep.subr.mxu0 0.0
    %718 = vmatpush1.msra.mxu0 0.0
    %719 = vmatprep.subr.mxu0 0.0
    %720 = vmatpush1.msra.mxu0 0.0
    %721 = vmatprep.subr.mxu0 0.0
    %722 = vmatpush1.msra.mxu0 0.0
    %723 = vmatprep.subr.mxu0 0.0
    %724 = vmatpush1.msra.mxu0 0.0
    %725 = vmatprep.subr.mxu0 0.0
    %726 = vmatpush1.msra.mxu0 0.0
    %727 = vmatprep.subr.mxu0 0.0
    %728 = vmatpush1.msra.mxu0 0.0
    %729 = vmatprep.subr.mxu0 0.0
    %730 = vmatpush1.msra.mxu0 0.0
    %731 = vmatprep.subr.mxu0 0.0
    %732 = vmatpush1.msra.mxu0 %v141
    %733 = vmatprep.subr.mxu0 0.0
    %734 = vmatpush1.msra.mxu0 %v135
    %735 = vmatprep.subr.mxu0 0.0
    %736 = vmatpush2.msra.mxu0 0.0
    %737 = vmatprep.subr.mxu0 0.0
    %738 = vmatpush2.msra.mxu0 0.0
    %739 = vmatprep.subr.mxu0 0.0
    %740 = vmatpush2.msra.mxu0 0.0
    %741 = vmatprep.subr.mxu0 0.0
    %742 = vmatpush2.msra.mxu0 0.0
    %743 = vmatprep.subr.mxu0 0.0
    %744 = vmatpush2.msra.mxu0 0.0
    %745 = vmatprep.subr.mxu0 0.0
    %746 = vmatpush2.msra.mxu0 0.0
    %747 = vmatprep.subr.mxu0 0.0
    %748 = vmatpush2.msra.mxu0 0.0
    %749 = vmatprep.subr.mxu0 0.0
    %750 = vmatpush2.msra.mxu0 0.0
    %751 = vmatprep.subr.mxu0 0.0
    %752 = vmatpush2.msra.mxu0 0.0
    %753 = vmatprep.subr.mxu0 0.0
    %754 = vmatpush2.msra.mxu0 0.0
    %755 = vmatprep.subr.mxu0 0.0
    %756 = vmatpush2.msra.mxu0 0.0
    %757 = vmatprep.subr.mxu0 0.0
    %758 = vmatpush2.msra.mxu0 0.0
    %759 = vmatprep.subr.mxu0 0.0
    %760 = vmatpush2.msra.mxu0 0.0
    %761 = vmatprep.subr.mxu0 0.0
    %762 = vmatpush2.msra.mxu0 0.0
    %763 = vmatprep.subr.mxu0 0.0
    %764 = vmatpush2.msra.mxu0 0.0
    %765 = vmatprep.subr.mxu0 0.0
    %766 = vmatpush2.msra.mxu0 0.0
    %767 = vmatprep.mubr.f32.mxu0 0.0
    %768 = vmatmul.mubr.f32.gmra.mxu0 %v656
    %v769 = vpop.f32.mrf.mxu0
    %v770 = vadd.f32 0.0, %v769
    %v771 = vpop.f32.mrf.mxu0
    %772 = vmatprep.mubr.f32.mxu0 0.0
    %773 = vmatmul.mubr.f32.gmra.mxu0 %v659
    %v774 = vpop.f32.mrf.mxu0
    %v775 = vadd.f32 0.0, %v774
    %v776 = vpop.f32.mrf.mxu0
    %777 = vmatprep.mubr.f32.mxu0 0.0
    %778 = vmatmul.mubr.f32.gmra.mxu0 %v662
    %v779 = vpop.f32.mrf.mxu0
    %v780 = vadd.f32 0.0, %v779
    %v781 = vpop.f32.mrf.mxu0
    %782 = vmatprep.mubr.f32.mxu0 0.0
    %783 = vmatmul.mubr.f32.gmra.mxu0 %v665
    %v784 = vpop.f32.mrf.mxu0
    %v785 = vadd.f32 0.0, %v784
    %v786 = vpop.f32.mrf.mxu0
    %787 = vmatprep.mubr.f32.mxu0 0.0
    %788 = vmatmul.mubr.f32.gmra.mxu0 %v668
    %v789 = vpop.f32.mrf.mxu0
    %v790 = vadd.f32 0.0, %v789
    %v791 = vpop.f32.mrf.mxu0
    %792 = vmatprep.mubr.f32.mxu0 0.0
    %793 = vmatmul.mubr.f32.gmra.mxu0 %v671
    %v794 = vpop.f32.mrf.mxu0
    %v795 = vadd.f32 0.0, %v794
    %v796 = vpop.f32.mrf.mxu0
    %797 = vmatprep.mubr.f32.mxu0 0.0
    %798 = vmatmul.mubr.f32.gmra.mxu0 %v674
    %v799 = vpop.f32.mrf.mxu0
    %v800 = vadd.f32 0.0, %v799
    %v801 = vpop.f32.mrf.mxu0
    %802 = vmatprep.mubr.f32.mxu0 0.0
    %803 = vmatmul.mubr.f32.gmra.mxu0 %v677
    %v804 = vpop.f32.mrf.mxu0
    %v805 = vadd.f32 0.0, %v804
    %v806 = vpop.f32.mrf.mxu0
    %807 = vmatprep.mubr.f32.mxu0 0.0
    %808 = vmatmul.mubr.f32.gmra.mxu0 %v680
    %v809 = vpop.f32.mrf.mxu0
    %v810 = vadd.f32 0.0, %v809
    %v811 = vpop.f32.mrf.mxu0
    %812 = vmatprep.mubr.f32.mxu0 0.0
    %813 = vmatmul.mubr.f32.gmra.mxu0 %v683
    %v814 = vpop.f32.mrf.mxu0
    %v815 = vadd.f32 0.0, %v814
    %v816 = vpop.f32.mrf.mxu0
    %817 = vmatprep.mubr.f32.mxu0 0.0
    %818 = vmatmul.mubr.f32.gmra.mxu0 %v686
    %v819 = vpop.f32.mrf.mxu0
    %v820 = vadd.f32 0.0, %v819
    %v821 = vpop.f32.mrf.mxu0
    %822 = vmatprep.mubr.f32.mxu0 0.0
    %823 = vmatmul.mubr.f32.gmra.mxu0 %v689
    %v824 = vpop.f32.mrf.mxu0
    %v825 = vadd.f32 0.0, %v824
    %v826 = vpop.f32.mrf.mxu0
    %827 = vmatprep.mubr.f32.mxu0 0.0
    %828 = vmatmul.mubr.f32.gmra.mxu0 %v692
    %v829 = vpop.f32.mrf.mxu0
    %v830 = vadd.f32 0.0, %v829
    %v831 = vpop.f32.mrf.mxu0
    %832 = vmatprep.mubr.f32.mxu0 0.0
    %833 = vmatmul.mubr.f32.gmra.mxu0 %v695
    %v834 = vpop.f32.mrf.mxu0
    %v835 = vadd.f32 0.0, %v834
    %v836 = vpop.f32.mrf.mxu0
    %837 = vmatprep.mubr.f32.mxu0 0.0
    %838 = vmatmul.mubr.f32.gmra.mxu0 %v698
    %v839 = vpop.f32.mrf.mxu0
    %v840 = vadd.f32 0.0, %v839
    %v841 = vpop.f32.mrf.mxu0
    %842 = vmatprep.mubr.f32.mxu0 0.0
    %843 = vmatmul.mubr.f32.gmra.mxu0 %v701
    %v844 = vpop.f32.mrf.mxu0
    %v845 = vadd.f32 0.0, %v844
    %v846 = vpop.f32.mrf.mxu0
    %847 = vdwg.mxu0
    %848 = vmatprep.subr.mxu0 0.0
    %849 = vmatpush1.msra.mxu0 0.0
    %850 = vmatprep.subr.mxu0 0.0
    %851 = vmatpush1.msra.mxu0 0.0
    %852 = vmatprep.subr.mxu0 0.0
    %853 = vmatpush1.msra.mxu0 0.0
    %854 = vmatprep.subr.mxu0 0.0
    %855 = vmatpush1.msra.mxu0 0.0
    %856 = vmatprep.subr.mxu0 0.0
    %857 = vmatpush1.msra.mxu0 0.0
    %858 = vmatprep.subr.mxu0 0.0
    %859 = vmatpush1.msra.mxu0 0.0
    %860 = vmatprep.subr.mxu0 0.0
    %861 = vmatpush1.msra.mxu0 0.0
    %862 = vmatprep.subr.mxu0 0.0
    %863 = vmatpush1.msra.mxu0 0.0
    %864 = vmatprep.subr.mxu0 0.0
    %865 = vmatpush1.msra.mxu0 0.0
    %866 = vmatprep.subr.mxu0 0.0
    %867 = vmatpush1.msra.mxu0 0.0
    %868 = vmatprep.subr.mxu0 0.0
    %869 = vmatpush1.msra.mxu0 0.0
    %870 = vmatprep.subr.mxu0 0.0
    %871 = vmatpush1.msra.mxu0 0.0
    %872 = vmatprep.subr.mxu0 0.0
    %873 = vmatpush1.msra.mxu0 0.0
    %874 = vmatprep.subr.mxu0 0.0
    %875 = vmatpush1.msra.mxu0 0.0
    %876 = vmatprep.subr.mxu0 0.0
    %877 = vmatpush1.msra.mxu0 %v215
    %878 = vmatprep.subr.mxu0 0.0
    %879 = vmatpush1.msra.mxu0 %v210
    %880 = vmatprep.subr.mxu0 0.0
    %881 = vmatpush2.msra.mxu0 0.0
    %882 = vmatprep.subr.mxu0 0.0
    %883 = vmatpush2.msra.mxu0 0.0
    %884 = vmatprep.subr.mxu0 0.0
    %885 = vmatpush2.msra.mxu0 0.0
    %886 = vmatprep.subr.mxu0 0.0
    %887 = vmatpush2.msra.mxu0 0.0
    %888 = vmatprep.subr.mxu0 0.0
    %889 = vmatpush2.msra.mxu0 0.0
    %890 = vmatprep.subr.mxu0 0.0
    %891 = vmatpush2.msra.mxu0 0.0
    %892 = vmatprep.subr.mxu0 0.0
    %893 = vmatpush2.msra.mxu0 0.0
    %894 = vmatprep.subr.mxu0 0.0
    %895 = vmatpush2.msra.mxu0 0.0
    %896 = vmatprep.subr.mxu0 0.0
    %897 = vmatpush2.msra.mxu0 0.0
    %898 = vmatprep.subr.mxu0 0.0
    %899 = vmatpush2.msra.mxu0 0.0
    %900 = vmatprep.subr.mxu0 0.0
    %901 = vmatpush2.msra.mxu0 0.0
    %902 = vmatprep.subr.mxu0 0.0
    %903 = vmatpush2.msra.mxu0 0.0
    %904 = vmatprep.subr.mxu0 0.0
    %905 = vmatpush2.msra.mxu0 0.0
    %906 = vmatprep.subr.mxu0 0.0
    %907 = vmatpush2.msra.mxu0 0.0
    %908 = vmatprep.subr.mxu0 0.0
    %909 = vmatpush2.msra.mxu0 0.0
    %910 = vmatprep.subr.mxu0 0.0
    %911 = vmatpush2.msra.mxu0 0.0
    %912 = vmatprep.mubr.f32.mxu0 0.0
    %913 = vmatmul.mubr.f32.gmra.mxu0 %v656
    %v914 = vpop.f32.mrf.mxu0
    %v915 = vadd.f32 0.0, %v914
    %v916 = vpop.f32.mrf.mxu0
    %917 = vmatprep.mubr.f32.mxu0 0.0
    %918 = vmatmul.mubr.f32.gmra.mxu0 %v659
    %v919 = vpop.f32.mrf.mxu0
    %v920 = vadd.f32 0.0, %v919
    %v921 = vpop.f32.mrf.mxu0
    %922 = vmatprep.mubr.f32.mxu0 0.0
    %923 = vmatmul.mubr.f32.gmra.mxu0 %v662
    %v924 = vpop.f32.mrf.mxu0
    %v925 = vadd.f32 0.0, %v924
    %v926 = vpop.f32.mrf.mxu0
    %927 = vmatprep.mubr.f32.mxu0 0.0
    %928 = vmatmul.mubr.f32.gmra.mxu0 %v665
    %v929 = vpop.f32.mrf.mxu0
    %v930 = vadd.f32 0.0, %v929
    %v931 = vpop.f32.mrf.mxu0
    %932 = vmatprep.mubr.f32.mxu0 0.0
    %933 = vmatmul.mubr.f32.gmra.mxu0 %v668
    %v934 = vpop.f32.mrf.mxu0
    %v935 = vadd.f32 0.0, %v934
    %v936 = vpop.f32.mrf.mxu0
    %937 = vmatprep.mubr.f32.mxu0 0.0
    %938 = vmatmul.mubr.f32.gmra.mxu0 %v671
    %v939 = vpop.f32.mrf.mxu0
    %v940 = vadd.f32 0.0, %v939
    %v941 = vpop.f32.mrf.mxu0
    %942 = vmatprep.mubr.f32.mxu0 0.0
    %943 = vmatmul.mubr.f32.gmra.mxu0 %v674
    %v944 = vpop.f32.mrf.mxu0
    %v945 = vadd.f32 0.0, %v944
    %v946 = vpop.f32.mrf.mxu0
    %947 = vmatprep.mubr.f32.mxu0 0.0
    %948 = vmatmul.mubr.f32.gmra.mxu0 %v677
    %v949 = vpop.f32.mrf.mxu0
    %v950 = vadd.f32 0.0, %v949
    %v951 = vpop.f32.mrf.mxu0
    %952 = vmatprep.mubr.f32.mxu0 0.0
    %953 = vmatmul.mubr.f32.gmra.mxu0 %v680
    %v954 = vpop.f32.mrf.mxu0
    %v955 = vadd.f32 0.0, %v954
    %v956 = vpop.f32.mrf.mxu0
    %957 = vmatprep.mubr.f32.mxu0 0.0
    %958 = vmatmul.mubr.f32.gmra.mxu0 %v683
    %v959 = vpop.f32.mrf.mxu0
    %v960 = vadd.f32 0.0, %v959
    %v961 = vpop.f32.mrf.mxu0
    %962 = vmatprep.mubr.f32.mxu0 0.0
    %963 = vmatmul.mubr.f32.gmra.mxu0 %v686
    %v964 = vpop.f32.mrf.mxu0
    %v965 = vadd.f32 0.0, %v964
    %v966 = vpop.f32.mrf.mxu0
    %967 = vmatprep.mubr.f32.mxu0 0.0
    %968 = vmatmul.mubr.f32.gmra.mxu0 %v689
    %v969 = vpop.f32.mrf.mxu0
    %v970 = vadd.f32 0.0, %v969
    %v971 = vpop.f32.mrf.mxu0
    %972 = vmatprep.mubr.f32.mxu0 0.0
    %973 = vmatmul.mubr.f32.gmra.mxu0 %v692
    %v974 = vpop.f32.mrf.mxu0
    %v975 = vadd.f32 0.0, %v974
    %v976 = vpop.f32.mrf.mxu0
    %977 = vmatprep.mubr.f32.mxu0 0.0
    %978 = vmatmul.mubr.f32.gmra.mxu0 %v695
    %v979 = vpop.f32.mrf.mxu0
    %v980 = vadd.f32 0.0, %v979
    %v981 = vpop.f32.mrf.mxu0
    %982 = vmatprep.mubr.f32.mxu0 0.0
    %983 = vmatmul.mubr.f32.gmra.mxu0 %v698
    %v984 = vpop.f32.mrf.mxu0
    %v985 = vadd.f32 0.0, %v984
    %v986 = vpop.f32.mrf.mxu0
    %987 = vmatprep.mubr.f32.mxu0 0.0
    %988 = vmatmul.mubr.f32.gmra.mxu0 %v701
    %v989 = vpop.f32.mrf.mxu0
    %v990 = vadd.f32 0.0, %v989
    %v991 = vpop.f32.mrf.mxu0
    %992 = vdwg.mxu0
    %v993 = vld [vmem:[%s4] sm:$0x1]
    %v995 = vlaneseq
    %v996 = vshrl.u32 %v995, 7
    %v997 = vsub.s32 0, %v996
    %v998 = vrot.slane %v993, %v997
    %v1000 = vadd.f32 %v561, %v998
    %v1001 = vadd.f32 %v566, %v998
    %v1002 = vadd.f32 %v571, %v998
    %v1003 = vadd.f32 %v576, %v998
    %v1004 = vadd.f32 %v581, %v998
    %v1005 = vadd.f32 %v586, %v998
    %v1006 = vadd.f32 %v591, %v998
    %v1007 = vadd.f32 %v596, %v998
    %v1008 = vadd.f32 %v601, %v998
    %v1009 = vadd.f32 %v606, %v998
    %v1010 = vadd.f32 %v611, %v998
    %v1011 = vadd.f32 %v616, %v998
    %v1012 = vadd.f32 %v621, %v998
    %v1013 = vadd.f32 %v626, %v998
    %v1014 = vadd.f32 %v631, %v998
    %v1015 = vadd.f32 %v636, %v998
    %v1016 = vmul.f32 %v1000, %v770
    %v1017 = vmul.f32 %v1001, %v775
    %v1018 = vmul.f32 %v1002, %v780
    %v1019 = vmul.f32 %v1003, %v785
    %v1020 = vmul.f32 %v1004, %v790
    %v1021 = vmul.f32 %v1005, %v795
    %v1022 = vmul.f32 %v1006, %v800
    %v1023 = vmul.f32 %v1007, %v805
    %v1024 = vmul.f32 %v1008, %v810
    %v1025 = vmul.f32 %v1009, %v815
    %v1026 = vmul.f32 %v1010, %v820
    %v1027 = vmul.f32 %v1011, %v825
    %v1028 = vmul.f32 %v1012, %v830
    %v1029 = vmul.f32 %v1013, %v835
    %v1030 = vmul.f32 %v1014, %v840
    %v1031 = vmul.f32 %v1015, %v845
    %v1032 = vld [vmem:[%s5] sm:$0x1]
    %v1034 = vlaneseq
    %v1035 = vshrl.u32 %v1034, 7
    %v1036 = vsub.s32 0, %v1035
    %v1037 = vrot.slane %v1032, %v1036
    %v1039 = vadd.f32 %v561, %v1037
    %v1040 = vadd.f32 %v566, %v1037
    %v1041 = vadd.f32 %v571, %v1037
    %v1042 = vadd.f32 %v576, %v1037
    %v1043 = vadd.f32 %v581, %v1037
    %v1044 = vadd.f32 %v586, %v1037
    %v1045 = vadd.f32 %v591, %v1037
    %v1046 = vadd.f32 %v596, %v1037
    %v1047 = vadd.f32 %v601, %v1037
    %v1048 = vadd.f32 %v606, %v1037
    %v1049 = vadd.f32 %v611, %v1037
    %v1050 = vadd.f32 %v616, %v1037
    %v1051 = vadd.f32 %v621, %v1037
    %v1052 = vadd.f32 %v626, %v1037
    %v1053 = vadd.f32 %v631, %v1037
    %v1054 = vadd.f32 %v636, %v1037
    %v1055 = vmul.f32 %v1039, %v351
    %v1056 = vmul.f32 %v1040, %v356
    %v1057 = vmul.f32 %v1041, %v361
    %v1058 = vmul.f32 %v1042, %v366
    %v1059 = vmul.f32 %v1043, %v371
    %v1060 = vmul.f32 %v1044, %v376
    %v1061 = vmul.f32 %v1045, %v381
    %v1062 = vmul.f32 %v1046, %v386
    %v1063 = vmul.f32 %v1047, %v391
    %v1064 = vmul.f32 %v1048, %v396
    %v1065 = vmul.f32 %v1049, %v401
    %v1066 = vmul.f32 %v1050, %v406
    %v1067 = vmul.f32 %v1051, %v411
    %v1068 = vmul.f32 %v1052, %v416
    %v1069 = vmul.f32 %v1053, %v421
    %v1070 = vmul.f32 %v1054, %v426
    %v1071 = vadd.f32 %v1016, %v1055
    %v1072 = vadd.f32 %v1017, %v1056
    %v1073 = vadd.f32 %v1018, %v1057
    %v1074 = vadd.f32 %v1019, %v1058
    %v1075 = vadd.f32 %v1020, %v1059
    %v1076 = vadd.f32 %v1021, %v1060
    %v1077 = vadd.f32 %v1022, %v1061
    %v1078 = vadd.f32 %v1023, %v1062
    %v1079 = vadd.f32 %v1024, %v1063
    %v1080 = vadd.f32 %v1025, %v1064
    %v1081 = vadd.f32 %v1026, %v1065
    %v1082 = vadd.f32 %v1027, %v1066
    %v1083 = vadd.f32 %v1028, %v1067
    %v1084 = vadd.f32 %v1029, %v1068
    %v1085 = vadd.f32 %v1030, %v1069
    %v1086 = vadd.f32 %v1031, %v1070
    %v1087 = vld [vmem:[%s9] sm:$0xff]
    %v1088 = vld [vmem:[%s9 + $0x8] sm:$0xff]
    %v1089 = vld [vmem:[%s9 + $0x10] sm:$0xff]
    %v1090 = vld [vmem:[%s9 + $0x18] sm:$0xff]
    %v1091 = vld [vmem:[%s9 + $0x20] sm:$0xff]
    %v1092 = vld [vmem:[%s9 + $0x28] sm:$0xff]
    %v1093 = vld [vmem:[%s9 + $0x30] sm:$0xff]
    %v1094 = vld [vmem:[%s9 + $0x38] sm:$0xff]
    %vm1095 = vcmask 523264
    %v1097 = vsel %vm1095, %v1071, 0
    %v1100 = vsel %vm1095, %v1072, 0
    %v1103 = vsel %vm1095, %v1073, 0
    %v1106 = vsel %vm1095, %v1074, 0
    %v1109 = vsel %vm1095, %v1075, 0
    %v1112 = vsel %vm1095, %v1076, 0
    %v1115 = vsel %vm1095, %v1077, 0
    %v1118 = vsel %vm1095, %v1078, 0
    %v1121 = vsel %vm1095, %v1079, 0
    %v1124 = vsel %vm1095, %v1080, 0
    %v1127 = vsel %vm1095, %v1081, 0
    %v1130 = vsel %vm1095, %v1082, 0
    %v1133 = vsel %vm1095, %v1083, 0
    %v1136 = vsel %vm1095, %v1084, 0
    %v1139 = vsel %vm1095, %v1085, 0
    %v1142 = vsel %vm1095, %v1086, 0
    %1144 = vmatprep.subr.mxu0 0.0
    %1145 = vmatpush1.msra.mxu0 0.0
    %1146 = vmatprep.subr.mxu0 0.0
    %1147 = vmatpush1.msra.mxu0 0.0
    %1148 = vmatprep.subr.mxu0 0.0
    %1149 = vmatpush1.msra.mxu0 0.0
    %1150 = vmatprep.subr.mxu0 0.0
    %1151 = vmatpush1.msra.mxu0 0.0
    %1152 = vmatprep.subr.mxu0 0.0
    %1153 = vmatpush1.msra.mxu0 0.0
    %1154 = vmatprep.subr.mxu0 0.0
    %1155 = vmatpush1.msra.mxu0 0.0
    %1156 = vmatprep.subr.mxu0 0.0
    %1157 = vmatpush1.msra.mxu0 0.0
    %1158 = vmatprep.subr.mxu0 0.0
    %1159 = vmatpush1.msra.mxu0 0.0
    %1160 = vmatprep.subr.mxu0 0.0
    %1161 = vmatpush1.msra.mxu0 %v1094
    %1162 = vmatprep.subr.mxu0 0.0
    %1163 = vmatpush1.msra.mxu0 %v1093
    %1164 = vmatprep.subr.mxu0 0.0
    %1165 = vmatpush1.msra.mxu0 %v1092
    %1166 = vmatprep.subr.mxu0 0.0
    %1167 = vmatpush1.msra.mxu0 %v1091
    %1168 = vmatprep.subr.mxu0 0.0
    %1169 = vmatpush1.msra.mxu0 %v1090
    %1170 = vmatprep.subr.mxu0 0.0
    %1171 = vmatpush1.msra.mxu0 %v1089
    %1172 = vmatprep.subr.mxu0 0.0
    %1173 = vmatpush1.msra.mxu0 %v1088
    %1174 = vmatprep.subr.mxu0 0.0
    %1175 = vmatpush1.msra.mxu0 %v1087
    %1176 = vmatprep.subr.mxu0 0.0
    %1177 = vmatpush2.msra.mxu0 0.0
    %1178 = vmatprep.subr.mxu0 0.0
    %1179 = vmatpush2.msra.mxu0 0.0
    %1180 = vmatprep.subr.mxu0 0.0
    %1181 = vmatpush2.msra.mxu0 0.0
    %1182 = vmatprep.subr.mxu0 0.0
    %1183 = vmatpush2.msra.mxu0 0.0
    %1184 = vmatprep.subr.mxu0 0.0
    %1185 = vmatpush2.msra.mxu0 0.0
    %1186 = vmatprep.subr.mxu0 0.0
    %1187 = vmatpush2.msra.mxu0 0.0
    %1188 = vmatprep.subr.mxu0 0.0
    %1189 = vmatpush2.msra.mxu0 0.0
    %1190 = vmatprep.subr.mxu0 0.0
    %1191 = vmatpush2.msra.mxu0 0.0
    %1192 = vmatprep.subr.mxu0 0.0
    %1193 = vmatpush2.msra.mxu0 0.0
    %1194 = vmatprep.subr.mxu0 0.0
    %1195 = vmatpush2.msra.mxu0 0.0
    %1196 = vmatprep.subr.mxu0 0.0
    %1197 = vmatpush2.msra.mxu0 0.0
    %1198 = vmatprep.subr.mxu0 0.0
    %1199 = vmatpush2.msra.mxu0 0.0
    %1200 = vmatprep.subr.mxu0 0.0
    %1201 = vmatpush2.msra.mxu0 0.0
    %1202 = vmatprep.subr.mxu0 0.0
    %1203 = vmatpush2.msra.mxu0 0.0
    %1204 = vmatprep.subr.mxu0 0.0
    %1205 = vmatpush2.msra.mxu0 0.0
    %1206 = vmatprep.subr.mxu0 0.0
    %1207 = vmatpush2.msra.mxu0 0.0
    %1208 = vmatprep.mubr.f32.mxu0 0.0
    %1209 = vmatmul.mubr.f32.gmra.mxu0 %v1097
    %v1210 = vpop.f32.mrf.mxu0
    %v1211 = vadd.f32 0.0, %v1210
    %v1212 = vpop.f32.mrf.mxu0
    %1213 = vmatprep.mubr.f32.mxu0 0.0
    %1214 = vmatmul.mubr.f32.gmra.mxu0 %v1100
    %v1215 = vpop.f32.mrf.mxu0
    %v1216 = vadd.f32 0.0, %v1215
    %v1217 = vpop.f32.mrf.mxu0
    %1218 = vmatprep.mubr.f32.mxu0 0.0
    %1219 = vmatmul.mubr.f32.gmra.mxu0 %v1103
    %v1220 = vpop.f32.mrf.mxu0
    %v1221 = vadd.f32 0.0, %v1220
    %v1222 = vpop.f32.mrf.mxu0
    %1223 = vmatprep.mubr.f32.mxu0 0.0
    %1224 = vmatmul.mubr.f32.gmra.mxu0 %v1106
    %v1225 = vpop.f32.mrf.mxu0
    %v1226 = vadd.f32 0.0, %v1225
    %v1227 = vpop.f32.mrf.mxu0
    %1228 = vmatprep.mubr.f32.mxu0 0.0
    %1229 = vmatmul.mubr.f32.gmra.mxu0 %v1109
    %v1230 = vpop.f32.mrf.mxu0
    %v1231 = vadd.f32 0.0, %v1230
    %v1232 = vpop.f32.mrf.mxu0
    %1233 = vmatprep.mubr.f32.mxu0 0.0
    %1234 = vmatmul.mubr.f32.gmra.mxu0 %v1112
    %v1235 = vpop.f32.mrf.mxu0
    %v1236 = vadd.f32 0.0, %v1235
    %v1237 = vpop.f32.mrf.mxu0
    %1238 = vmatprep.mubr.f32.mxu0 0.0
    %1239 = vmatmul.mubr.f32.gmra.mxu0 %v1115
    %v1240 = vpop.f32.mrf.mxu0
    %v1241 = vadd.f32 0.0, %v1240
    %v1242 = vpop.f32.mrf.mxu0
    %1243 = vmatprep.mubr.f32.mxu0 0.0
    %1244 = vmatmul.mubr.f32.gmra.mxu0 %v1118
    %v1245 = vpop.f32.mrf.mxu0
    %v1246 = vadd.f32 0.0, %v1245
    %v1247 = vpop.f32.mrf.mxu0
    %1248 = vmatprep.mubr.f32.mxu0 0.0
    %1249 = vmatmul.mubr.f32.gmra.mxu0 %v1121
    %v1250 = vpop.f32.mrf.mxu0
    %v1251 = vadd.f32 0.0, %v1250
    %v1252 = vpop.f32.mrf.mxu0
    %1253 = vmatprep.mubr.f32.mxu0 0.0
    %1254 = vmatmul.mubr.f32.gmra.mxu0 %v1124
    %v1255 = vpop.f32.mrf.mxu0
    %v1256 = vadd.f32 0.0, %v1255
    %v1257 = vpop.f32.mrf.mxu0
    %1258 = vmatprep.mubr.f32.mxu0 0.0
    %1259 = vmatmul.mubr.f32.gmra.mxu0 %v1127
    %v1260 = vpop.f32.mrf.mxu0
    %v1261 = vadd.f32 0.0, %v1260
    %v1262 = vpop.f32.mrf.mxu0
    %1263 = vmatprep.mubr.f32.mxu0 0.0
    %1264 = vmatmul.mubr.f32.gmra.mxu0 %v1130
    %v1265 = vpop.f32.mrf.mxu0
    %v1266 = vadd.f32 0.0, %v1265
    %v1267 = vpop.f32.mrf.mxu0
    %1268 = vmatprep.mubr.f32.mxu0 0.0
    %1269 = vmatmul.mubr.f32.gmra.mxu0 %v1133
    %v1270 = vpop.f32.mrf.mxu0
    %v1271 = vadd.f32 0.0, %v1270
    %v1272 = vpop.f32.mrf.mxu0
    %1273 = vmatprep.mubr.f32.mxu0 0.0
    %1274 = vmatmul.mubr.f32.gmra.mxu0 %v1136
    %v1275 = vpop.f32.mrf.mxu0
    %v1276 = vadd.f32 0.0, %v1275
    %v1277 = vpop.f32.mrf.mxu0
    %1278 = vmatprep.mubr.f32.mxu0 0.0
    %1279 = vmatmul.mubr.f32.gmra.mxu0 %v1139
    %v1280 = vpop.f32.mrf.mxu0
    %v1281 = vadd.f32 0.0, %v1280
    %v1282 = vpop.f32.mrf.mxu0
    %1283 = vmatprep.mubr.f32.mxu0 0.0
    %1284 = vmatmul.mubr.f32.gmra.mxu0 %v1142
    %v1285 = vpop.f32.mrf.mxu0
    %v1286 = vadd.f32 0.0, %v1285
    %v1287 = vpop.f32.mrf.mxu0
    %1288 = vdwg.mxu0
    %vm1289 = vcmask 31744
    %v1290 = vsel %vm1289, %v1211, -inf
    %v1291 = vrot.slane %v1290, 4
    %v1292 = vmax.f32 %v1290, %v1291
    %v1293 = vrot.slane %v1292, 2
    %v1294 = vmax.f32 %v1292, %v1293
    %v1295 = vrot.slane %v1294, 1
    %v1296 = vmax.f32 %v1294, %v1295
    %v1297 = vsel %vm1289, %v1216, -inf
    %v1298 = vrot.slane %v1297, 4
    %v1299 = vmax.f32 %v1297, %v1298
    %v1300 = vrot.slane %v1299, 2
    %v1301 = vmax.f32 %v1299, %v1300
    %v1302 = vrot.slane %v1301, 1
    %v1303 = vmax.f32 %v1301, %v1302
    %v1304 = vsel %vm1289, %v1221, -inf
    %v1305 = vrot.slane %v1304, 4
    %v1306 = vmax.f32 %v1304, %v1305
    %v1307 = vrot.slane %v1306, 2
    %v1308 = vmax.f32 %v1306, %v1307
    %v1309 = vrot.slane %v1308, 1
    %v1310 = vmax.f32 %v1308, %v1309
    %v1311 = vsel %vm1289, %v1226, -inf
    %v1312 = vrot.slane %v1311, 4
    %v1313 = vmax.f32 %v1311, %v1312
    %v1314 = vrot.slane %v1313, 2
    %v1315 = vmax.f32 %v1313, %v1314
    %v1316 = vrot.slane %v1315, 1
    %v1317 = vmax.f32 %v1315, %v1316
    %v1318 = vsel %vm1289, %v1231, -inf
    %v1319 = vrot.slane %v1318, 4
    %v1320 = vmax.f32 %v1318, %v1319
    %v1321 = vrot.slane %v1320, 2
    %v1322 = vmax.f32 %v1320, %v1321
    %v1323 = vrot.slane %v1322, 1
    %v1324 = vmax.f32 %v1322, %v1323
    %v1325 = vsel %vm1289, %v1236, -inf
    %v1326 = vrot.slane %v1325, 4
    %v1327 = vmax.f32 %v1325, %v1326
    %v1328 = vrot.slane %v1327, 2
    %v1329 = vmax.f32 %v1327, %v1328
    %v1330 = vrot.slane %v1329, 1
    %v1331 = vmax.f32 %v1329, %v1330
    %v1332 = vsel %vm1289, %v1241, -inf
    %v1333 = vrot.slane %v1332, 4
    %v1334 = vmax.f32 %v1332, %v1333
    %v1335 = vrot.slane %v1334, 2
    %v1336 = vmax.f32 %v1334, %v1335
    %v1337 = vrot.slane %v1336, 1
    %v1338 = vmax.f32 %v1336, %v1337
    %v1339 = vsel %vm1289, %v1246, -inf
    %v1340 = vrot.slane %v1339, 4
    %v1341 = vmax.f32 %v1339, %v1340
    %v1342 = vrot.slane %v1341, 2
    %v1343 = vmax.f32 %v1341, %v1342
    %v1344 = vrot.slane %v1343, 1
    %v1345 = vmax.f32 %v1343, %v1344
    %v1346 = vsel %vm1289, %v1251, -inf
    %v1347 = vrot.slane %v1346, 4
    %v1348 = vmax.f32 %v1346, %v1347
    %v1349 = vrot.slane %v1348, 2
    %v1350 = vmax.f32 %v1348, %v1349
    %v1351 = vrot.slane %v1350, 1
    %v1352 = vmax.f32 %v1350, %v1351
    %v1353 = vsel %vm1289, %v1256, -inf
    %v1354 = vrot.slane %v1353, 4
    %v1355 = vmax.f32 %v1353, %v1354
    %v1356 = vrot.slane %v1355, 2
    %v1357 = vmax.f32 %v1355, %v1356
    %v1358 = vrot.slane %v1357, 1
    %v1359 = vmax.f32 %v1357, %v1358
    %v1360 = vsel %vm1289, %v1261, -inf
    %v1361 = vrot.slane %v1360, 4
    %v1362 = vmax.f32 %v1360, %v1361
    %v1363 = vrot.slane %v1362, 2
    %v1364 = vmax.f32 %v1362, %v1363
    %v1365 = vrot.slane %v1364, 1
    %v1366 = vmax.f32 %v1364, %v1365
    %v1367 = vsel %vm1289, %v1266, -inf
    %v1368 = vrot.slane %v1367, 4
    %v1369 = vmax.f32 %v1367, %v1368
    %v1370 = vrot.slane %v1369, 2
    %v1371 = vmax.f32 %v1369, %v1370
    %v1372 = vrot.slane %v1371, 1
    %v1373 = vmax.f32 %v1371, %v1372
    %v1374 = vsel %vm1289, %v1271, -inf
    %v1375 = vrot.slane %v1374, 4
    %v1376 = vmax.f32 %v1374, %v1375
    %v1377 = vrot.slane %v1376, 2
    %v1378 = vmax.f32 %v1376, %v1377
    %v1379 = vrot.slane %v1378, 1
    %v1380 = vmax.f32 %v1378, %v1379
    %v1381 = vsel %vm1289, %v1276, -inf
    %v1382 = vrot.slane %v1381, 4
    %v1383 = vmax.f32 %v1381, %v1382
    %v1384 = vrot.slane %v1383, 2
    %v1385 = vmax.f32 %v1383, %v1384
    %v1386 = vrot.slane %v1385, 1
    %v1387 = vmax.f32 %v1385, %v1386
    %v1388 = vsel %vm1289, %v1281, -inf
    %v1389 = vrot.slane %v1388, 4
    %v1390 = vmax.f32 %v1388, %v1389
    %v1391 = vrot.slane %v1390, 2
    %v1392 = vmax.f32 %v1390, %v1391
    %v1393 = vrot.slane %v1392, 1
    %v1394 = vmax.f32 %v1392, %v1393
    %v1395 = vsel %vm1289, %v1286, -inf
    %v1396 = vrot.slane %v1395, 4
    %v1397 = vmax.f32 %v1395, %v1396
    %v1398 = vrot.slane %v1397, 2
    %v1399 = vmax.f32 %v1397, %v1398
    %v1400 = vrot.slane %v1399, 1
    %v1401 = vmax.f32 %v1399, %v1400
    %v1402 = vsub.f32 %v1211, %v1296
    %v1403 = vsub.f32 %v1216, %v1303
    %v1404 = vsub.f32 %v1221, %v1310
    %v1405 = vsub.f32 %v1226, %v1317
    %v1406 = vsub.f32 %v1231, %v1324
    %v1407 = vsub.f32 %v1236, %v1331
    %v1408 = vsub.f32 %v1241, %v1338
    %v1409 = vsub.f32 %v1246, %v1345
    %v1410 = vsub.f32 %v1251, %v1352
    %v1411 = vsub.f32 %v1256, %v1359
    %v1412 = vsub.f32 %v1261, %v1366
    %v1413 = vsub.f32 %v1266, %v1373
    %v1414 = vsub.f32 %v1271, %v1380
    %v1415 = vsub.f32 %v1276, %v1387
    %v1416 = vsub.f32 %v1281, %v1394
    %v1417 = vsub.f32 %v1286, %v1401
    %v1418 = vmul.f32 %v1402, 1.442695
    %v1419 = vpow.pop %v1418
    %v1420 = vmul.f32 %v1403, 1.442695
    %v1421 = vpow.pop %v1420
    %v1422 = vmul.f32 %v1404, 1.442695
    %v1423 = vpow.pop %v1422
    %v1424 = vmul.f32 %v1405, 1.442695
    %v1425 = vpow.pop %v1424
    %v1426 = vmul.f32 %v1406, 1.442695
    %v1427 = vpow.pop %v1426
    %v1428 = vmul.f32 %v1407, 1.442695
    %v1429 = vpow.pop %v1428
    %v1430 = vmul.f32 %v1408, 1.442695
    %v1431 = vpow.pop %v1430
    %v1432 = vmul.f32 %v1409, 1.442695
    %v1433 = vpow.pop %v1432
    %v1434 = vmul.f32 %v1410, 1.442695
    %v1435 = vpow.pop %v1434
    %v1436 = vmul.f32 %v1411, 1.442695
    %v1437 = vpow.pop %v1436
    %v1438 = vmul.f32 %v1412, 1.442695
    %v1439 = vpow.pop %v1438
    %v1440 = vmul.f32 %v1413, 1.442695
    %v1441 = vpow.pop %v1440
    %v1442 = vmul.f32 %v1414, 1.442695
    %v1443 = vpow.pop %v1442
    %v1444 = vmul.f32 %v1415, 1.442695
    %v1445 = vpow.pop %v1444
    %v1446 = vmul.f32 %v1416, 1.442695
    %v1447 = vpow.pop %v1446
    %v1448 = vmul.f32 %v1417, 1.442695
    %v1449 = vpow.pop %v1448
    %v1450 = vsel %vm1289, %v1419, 0.0
    %v1451 = vrot.slane %v1450, 4
    %v1452 = vadd.f32 %v1450, %v1451
    %v1453 = vrot.slane %v1452, 2
    %v1454 = vadd.f32 %v1452, %v1453
    %v1455 = vrot.slane %v1454, 1
    %v1456 = vadd.f32 %v1454, %v1455
    %v1457 = vsel %vm1289, %v1421, 0.0
    %v1458 = vrot.slane %v1457, 4
    %v1459 = vadd.f32 %v1457, %v1458
    %v1460 = vrot.slane %v1459, 2
    %v1461 = vadd.f32 %v1459, %v1460
    %v1462 = vrot.slane %v1461, 1
    %v1463 = vadd.f32 %v1461, %v1462
    %v1464 = vsel %vm1289, %v1423, 0.0
    %v1465 = vrot.slane %v1464, 4
    %v1466 = vadd.f32 %v1464, %v1465
    %v1467 = vrot.slane %v1466, 2
    %v1468 = vadd.f32 %v1466, %v1467
    %v1469 = vrot.slane %v1468, 1
    %v1470 = vadd.f32 %v1468, %v1469
    %v1471 = vsel %vm1289, %v1425, 0.0
    %v1472 = vrot.slane %v1471, 4
    %v1473 = vadd.f32 %v1471, %v1472
    %v1474 = vrot.slane %v1473, 2
    %v1475 = vadd.f32 %v1473, %v1474
    %v1476 = vrot.slane %v1475, 1
    %v1477 = vadd.f32 %v1475, %v1476
    %v1478 = vsel %vm1289, %v1427, 0.0
    %v1479 = vrot.slane %v1478, 4
    %v1480 = vadd.f32 %v1478, %v1479
    %v1481 = vrot.slane %v1480, 2
    %v1482 = vadd.f32 %v1480, %v1481
    %v1483 = vrot.slane %v1482, 1
    %v1484 = vadd.f32 %v1482, %v1483
    %v1485 = vsel %vm1289, %v1429, 0.0
    %v1486 = vrot.slane %v1485, 4
    %v1487 = vadd.f32 %v1485, %v1486
    %v1488 = vrot.slane %v1487, 2
    %v1489 = vadd.f32 %v1487, %v1488
    %v1490 = vrot.slane %v1489, 1
    %v1491 = vadd.f32 %v1489, %v1490
    %v1492 = vsel %vm1289, %v1431, 0.0
    %v1493 = vrot.slane %v1492, 4
    %v1494 = vadd.f32 %v1492, %v1493
    %v1495 = vrot.slane %v1494, 2
    %v1496 = vadd.f32 %v1494, %v1495
    %v1497 = vrot.slane %v1496, 1
    %v1498 = vadd.f32 %v1496, %v1497
    %v1499 = vsel %vm1289, %v1433, 0.0
    %v1500 = vrot.slane %v1499, 4
    %v1501 = vadd.f32 %v1499, %v1500
    %v1502 = vrot.slane %v1501, 2
    %v1503 = vadd.f32 %v1501, %v1502
    %v1504 = vrot.slane %v1503, 1
    %v1505 = vadd.f32 %v1503, %v1504
    %v1506 = vsel %vm1289, %v1435, 0.0
    %v1507 = vrot.slane %v1506, 4
    %v1508 = vadd.f32 %v1506, %v1507
    %v1509 = vrot.slane %v1508, 2
    %v1510 = vadd.f32 %v1508, %v1509
    %v1511 = vrot.slane %v1510, 1
    %v1512 = vadd.f32 %v1510, %v1511
    %v1513 = vsel %vm1289, %v1437, 0.0
    %v1514 = vrot.slane %v1513, 4
    %v1515 = vadd.f32 %v1513, %v1514
    %v1516 = vrot.slane %v1515, 2
    %v1517 = vadd.f32 %v1515, %v1516
    %v1518 = vrot.slane %v1517, 1
    %v1519 = vadd.f32 %v1517, %v1518
    %v1520 = vsel %vm1289, %v1439, 0.0
    %v1521 = vrot.slane %v1520, 4
    %v1522 = vadd.f32 %v1520, %v1521
    %v1523 = vrot.slane %v1522, 2
    %v1524 = vadd.f32 %v1522, %v1523
    %v1525 = vrot.slane %v1524, 1
    %v1526 = vadd.f32 %v1524, %v1525
    %v1527 = vsel %vm1289, %v1441, 0.0
    %v1528 = vrot.slane %v1527, 4
    %v1529 = vadd.f32 %v1527, %v1528
    %v1530 = vrot.slane %v1529, 2
    %v1531 = vadd.f32 %v1529, %v1530
    %v1532 = vrot.slane %v1531, 1
    %v1533 = vadd.f32 %v1531, %v1532
    %v1534 = vsel %vm1289, %v1443, 0.0
    %v1535 = vrot.slane %v1534, 4
    %v1536 = vadd.f32 %v1534, %v1535
    %v1537 = vrot.slane %v1536, 2
    %v1538 = vadd.f32 %v1536, %v1537
    %v1539 = vrot.slane %v1538, 1
    %v1540 = vadd.f32 %v1538, %v1539
    %v1541 = vsel %vm1289, %v1445, 0.0
    %v1542 = vrot.slane %v1541, 4
    %v1543 = vadd.f32 %v1541, %v1542
    %v1544 = vrot.slane %v1543, 2
    %v1545 = vadd.f32 %v1543, %v1544
    %v1546 = vrot.slane %v1545, 1
    %v1547 = vadd.f32 %v1545, %v1546
    %v1548 = vsel %vm1289, %v1447, 0.0
    %v1549 = vrot.slane %v1548, 4
    %v1550 = vadd.f32 %v1548, %v1549
    %v1551 = vrot.slane %v1550, 2
    %v1552 = vadd.f32 %v1550, %v1551
    %v1553 = vrot.slane %v1552, 1
    %v1554 = vadd.f32 %v1552, %v1553
    %v1555 = vsel %vm1289, %v1449, 0.0
    %v1556 = vrot.slane %v1555, 4
    %v1557 = vadd.f32 %v1555, %v1556
    %v1558 = vrot.slane %v1557, 2
    %v1559 = vadd.f32 %v1557, %v1558
    %v1560 = vrot.slane %v1559, 1
    %v1561 = vadd.f32 %v1559, %v1560
    %v1562 = vrcp.pop %v1456
    %v1563 = vrcp.pop %v1463
    %v1564 = vrcp.pop %v1470
    %v1565 = vrcp.pop %v1477
    %v1566 = vrcp.pop %v1484
    %v1567 = vrcp.pop %v1491
    %v1568 = vrcp.pop %v1498
    %v1569 = vrcp.pop %v1505
    %v1570 = vrcp.pop %v1512
    %v1571 = vrcp.pop %v1519
    %v1572 = vrcp.pop %v1526
    %v1573 = vrcp.pop %v1533
    %v1574 = vrcp.pop %v1540
    %v1575 = vrcp.pop %v1547
    %v1576 = vrcp.pop %v1554
    %v1577 = vrcp.pop %v1561
    %v1578 = vmul.f32 %v1419, %v1562
    %v1579 = vmul.f32 %v1421, %v1563
    %v1580 = vmul.f32 %v1423, %v1564
    %v1581 = vmul.f32 %v1425, %v1565
    %v1582 = vmul.f32 %v1427, %v1566
    %v1583 = vmul.f32 %v1429, %v1567
    %v1584 = vmul.f32 %v1431, %v1568
    %v1585 = vmul.f32 %v1433, %v1569
    %v1586 = vmul.f32 %v1435, %v1570
    %v1587 = vmul.f32 %v1437, %v1571
    %v1588 = vmul.f32 %v1439, %v1572
    %v1589 = vmul.f32 %v1441, %v1573
    %v1590 = vmul.f32 %v1443, %v1574
    %v1591 = vmul.f32 %v1445, %v1575
    %v1592 = vmul.f32 %v1447, %v1576
    %v1593 = vmul.f32 %v1449, %v1577
    %v1594 = vld [vmem:[%s10] sm:$0xf]
    %v1596 = vsel %vm1289, %v1578, 0
    %v1599 = vsel %vm1289, %v1579, 0
    %v1602 = vsel %vm1289, %v1580, 0
    %v1605 = vsel %vm1289, %v1581, 0
    %v1608 = vsel %vm1289, %v1582, 0
    %v1611 = vsel %vm1289, %v1583, 0
    %v1614 = vsel %vm1289, %v1584, 0
    %v1617 = vsel %vm1289, %v1585, 0
    %v1620 = vsel %vm1289, %v1586, 0
    %v1623 = vsel %vm1289, %v1587, 0
    %v1626 = vsel %vm1289, %v1588, 0
    %v1629 = vsel %vm1289, %v1589, 0
    %v1632 = vsel %vm1289, %v1590, 0
    %v1635 = vsel %vm1289, %v1591, 0
    %v1638 = vsel %vm1289, %v1592, 0
    %v1641 = vsel %vm1289, %v1593, 0
    %vm1643 = vcmask 1043456
    %v1645 = vsel %vm1643, %v1594, 0
    %1647 = vmatprep.subr.mxu0 0.0
    %1648 = vmatpush1.msra.mxu0 0.0
    %1649 = vmatprep.subr.mxu0 0.0
    %1650 = vmatpush1.msra.mxu0 0.0
    %1651 = vmatprep.subr.mxu0 0.0
    %1652 = vmatpush1.msra.mxu0 0.0
    %1653 = vmatprep.subr.mxu0 0.0
    %1654 = vmatpush1.msra.mxu0 0.0
    %1655 = vmatprep.subr.mxu0 0.0
    %1656 = vmatpush1.msra.mxu0 0.0
    %1657 = vmatprep.subr.mxu0 0.0
    %1658 = vmatpush1.msra.mxu0 0.0
    %1659 = vmatprep.subr.mxu0 0.0
    %1660 = vmatpush1.msra.mxu0 0.0
    %1661 = vmatprep.subr.mxu0 0.0
    %1662 = vmatpush1.msra.mxu0 0.0
    %1663 = vmatprep.subr.mxu0 0.0
    %1664 = vmatpush1.msra.mxu0 0.0
    %1665 = vmatprep.subr.mxu0 0.0
    %1666 = vmatpush1.msra.mxu0 0.0
    %1667 = vmatprep.subr.mxu0 0.0
    %1668 = vmatpush1.msra.mxu0 0.0
    %1669 = vmatprep.subr.mxu0 0.0
    %1670 = vmatpush1.msra.mxu0 0.0
    %1671 = vmatprep.subr.mxu0 0.0
    %1672 = vmatpush1.msra.mxu0 0.0
    %1673 = vmatprep.subr.mxu0 0.0
    %1674 = vmatpush1.msra.mxu0 0.0
    %1675 = vmatprep.subr.mxu0 0.0
    %1676 = vmatpush1.msra.mxu0 0.0
    %1677 = vmatprep.subr.mxu0 0.0
    %1678 = vmatpush1.msra.mxu0 %v1645
    %1679 = vmatprep.subr.mxu0 0.0
    %1680 = vmatpush2.msra.mxu0 0.0
    %1681 = vmatprep.subr.mxu0 0.0
    %1682 = vmatpush2.msra.mxu0 0.0
    %1683 = vmatprep.subr.mxu0 0.0
    %1684 = vmatpush2.msra.mxu0 0.0
    %1685 = vmatprep.subr.mxu0 0.0
    %1686 = vmatpush2.msra.mxu0 0.0
    %1687 = vmatprep.subr.mxu0 0.0
    %1688 = vmatpush2.msra.mxu0 0.0
    %1689 = vmatprep.subr.mxu0 0.0
    %1690 = vmatpush2.msra.mxu0 0.0
    %1691 = vmatprep.subr.mxu0 0.0
    %1692 = vmatpush2.msra.mxu0 0.0
    %1693 = vmatprep.subr.mxu0 0.0
    %1694 = vmatpush2.msra.mxu0 0.0
    %1695 = vmatprep.subr.mxu0 0.0
    %1696 = vmatpush2.msra.mxu0 0.0
    %1697 = vmatprep.subr.mxu0 0.0
    %1698 = vmatpush2.msra.mxu0 0.0
    %1699 = vmatprep.subr.mxu0 0.0
    %1700 = vmatpush2.msra.mxu0 0.0
    %1701 = vmatprep.subr.mxu0 0.0
    %1702 = vmatpush2.msra.mxu0 0.0
    %1703 = vmatprep.subr.mxu0 0.0
    %1704 = vmatpush2.msra.mxu0 0.0
    %1705 = vmatprep.subr.mxu0 0.0
    %1706 = vmatpush2.msra.mxu0 0.0
    %1707 = vmatprep.subr.mxu0 0.0
    %1708 = vmatpush2.msra.mxu0 0.0
    %1709 = vmatprep.subr.mxu0 0.0
    %1710 = vmatpush2.msra.mxu0 0.0
    %1711 = vmatprep.mubr.f32.mxu0 0.0
    %1712 = vmatmul.mubr.f32.gmra.mxu0 %v1596
    %v1713 = vpop.f32.mrf.mxu0
    %v1714 = vadd.f32 0.0, %v1713
    %v1715 = vpop.f32.mrf.mxu0
    %1716 = vmatprep.mubr.f32.mxu0 0.0
    %1717 = vmatmul.mubr.f32.gmra.mxu0 %v1599
    %v1718 = vpop.f32.mrf.mxu0
    %v1719 = vadd.f32 0.0, %v1718
    %v1720 = vpop.f32.mrf.mxu0
    %1721 = vmatprep.mubr.f32.mxu0 0.0
    %1722 = vmatmul.mubr.f32.gmra.mxu0 %v1602
    %v1723 = vpop.f32.mrf.mxu0
    %v1724 = vadd.f32 0.0, %v1723
    %v1725 = vpop.f32.mrf.mxu0
    %1726 = vmatprep.mubr.f32.mxu0 0.0
    %1727 = vmatmul.mubr.f32.gmra.mxu0 %v1605
    %v1728 = vpop.f32.mrf.mxu0
    %v1729 = vadd.f32 0.0, %v1728
    %v1730 = vpop.f32.mrf.mxu0
    %1731 = vmatprep.mubr.f32.mxu0 0.0
    %1732 = vmatmul.mubr.f32.gmra.mxu0 %v1608
    %v1733 = vpop.f32.mrf.mxu0
    %v1734 = vadd.f32 0.0, %v1733
    %v1735 = vpop.f32.mrf.mxu0
    %1736 = vmatprep.mubr.f32.mxu0 0.0
    %1737 = vmatmul.mubr.f32.gmra.mxu0 %v1611
    %v1738 = vpop.f32.mrf.mxu0
    %v1739 = vadd.f32 0.0, %v1738
    %v1740 = vpop.f32.mrf.mxu0
    %1741 = vmatprep.mubr.f32.mxu0 0.0
    %1742 = vmatmul.mubr.f32.gmra.mxu0 %v1614
    %v1743 = vpop.f32.mrf.mxu0
    %v1744 = vadd.f32 0.0, %v1743
    %v1745 = vpop.f32.mrf.mxu0
    %1746 = vmatprep.mubr.f32.mxu0 0.0
    %1747 = vmatmul.mubr.f32.gmra.mxu0 %v1617
    %v1748 = vpop.f32.mrf.mxu0
    %v1749 = vadd.f32 0.0, %v1748
    %v1750 = vpop.f32.mrf.mxu0
    %1751 = vmatprep.mubr.f32.mxu0 0.0
    %1752 = vmatmul.mubr.f32.gmra.mxu0 %v1620
    %v1753 = vpop.f32.mrf.mxu0
    %v1754 = vadd.f32 0.0, %v1753
    %v1755 = vpop.f32.mrf.mxu0
    %1756 = vmatprep.mubr.f32.mxu0 0.0
    %1757 = vmatmul.mubr.f32.gmra.mxu0 %v1623
    %v1758 = vpop.f32.mrf.mxu0
    %v1759 = vadd.f32 0.0, %v1758
    %v1760 = vpop.f32.mrf.mxu0
    %1761 = vmatprep.mubr.f32.mxu0 0.0
    %1762 = vmatmul.mubr.f32.gmra.mxu0 %v1626
    %v1763 = vpop.f32.mrf.mxu0
    %v1764 = vadd.f32 0.0, %v1763
    %v1765 = vpop.f32.mrf.mxu0
    %1766 = vmatprep.mubr.f32.mxu0 0.0
    %1767 = vmatmul.mubr.f32.gmra.mxu0 %v1629
    %v1768 = vpop.f32.mrf.mxu0
    %v1769 = vadd.f32 0.0, %v1768
    %v1770 = vpop.f32.mrf.mxu0
    %1771 = vmatprep.mubr.f32.mxu0 0.0
    %1772 = vmatmul.mubr.f32.gmra.mxu0 %v1632
    %v1773 = vpop.f32.mrf.mxu0
    %v1774 = vadd.f32 0.0, %v1773
    %v1775 = vpop.f32.mrf.mxu0
    %1776 = vmatprep.mubr.f32.mxu0 0.0
    %1777 = vmatmul.mubr.f32.gmra.mxu0 %v1635
    %v1778 = vpop.f32.mrf.mxu0
    %v1779 = vadd.f32 0.0, %v1778
    %v1780 = vpop.f32.mrf.mxu0
    %1781 = vmatprep.mubr.f32.mxu0 0.0
    %1782 = vmatmul.mubr.f32.gmra.mxu0 %v1638
    %v1783 = vpop.f32.mrf.mxu0
    %v1784 = vadd.f32 0.0, %v1783
    %v1785 = vpop.f32.mrf.mxu0
    %1786 = vmatprep.mubr.f32.mxu0 0.0
    %1787 = vmatmul.mubr.f32.gmra.mxu0 %v1641
    %v1788 = vpop.f32.mrf.mxu0
    %v1789 = vadd.f32 0.0, %v1788
    %v1790 = vpop.f32.mrf.mxu0
    %1791 = vdwg.mxu0
    %v1792 = vld [vmem:[%s8] sm:$0xff]
    %v1793 = vld [vmem:[%s8 + $0x8] sm:$0xff]
    %v1794 = vmul.f32 %v1714, %v915
    %v1795 = vmul.f32 %v1719, %v920
    %v1796 = vmul.f32 %v1724, %v925
    %v1797 = vmul.f32 %v1729, %v930
    %v1798 = vmul.f32 %v1734, %v935
    %v1799 = vmul.f32 %v1739, %v940
    %v1800 = vmul.f32 %v1744, %v945
    %v1801 = vmul.f32 %v1749, %v950
    %v1802 = vmul.f32 %v1754, %v955
    %v1803 = vmul.f32 %v1759, %v960
    %v1804 = vmul.f32 %v1764, %v965
    %v1805 = vmul.f32 %v1769, %v970
    %v1806 = vmul.f32 %v1774, %v975
    %v1807 = vmul.f32 %v1779, %v980
    %v1808 = vmul.f32 %v1784, %v985
    %v1809 = vmul.f32 %v1789, %v990
    %1810 = vmatprep.subr.mxu0 0.0
    %1811 = vmatpush1.msra.mxu0 %v1809
    %1812 = vmatprep.subr.mxu0 0.0
    %1813 = vmatpush1.msra.mxu0 %v1808
    %1814 = vmatprep.subr.mxu0 0.0
    %1815 = vmatpush1.msra.mxu0 %v1807
    %1816 = vmatprep.subr.mxu0 0.0
    %1817 = vmatpush1.msra.mxu0 %v1806
    %1818 = vmatprep.subr.mxu0 0.0
    %1819 = vmatpush1.msra.mxu0 %v1805
    %1820 = vmatprep.subr.mxu0 0.0
    %1821 = vmatpush1.msra.mxu0 %v1804
    %1822 = vmatprep.subr.mxu0 0.0
    %1823 = vmatpush1.msra.mxu0 %v1803
    %1824 = vmatprep.subr.mxu0 0.0
    %1825 = vmatpush1.msra.mxu0 %v1802
    %1826 = vmatprep.subr.mxu0 0.0
    %1827 = vmatpush1.msra.mxu0 %v1801
    %1828 = vmatprep.subr.mxu0 0.0
    %1829 = vmatpush1.msra.mxu0 %v1800
    %1830 = vmatprep.subr.mxu0 0.0
    %1831 = vmatpush1.msra.mxu0 %v1799
    %1832 = vmatprep.subr.mxu0 0.0
    %1833 = vmatpush1.msra.mxu0 %v1798
    %1834 = vmatprep.subr.mxu0 0.0
    %1835 = vmatpush1.msra.mxu0 %v1797
    %1836 = vmatprep.subr.mxu0 0.0
    %1837 = vmatpush1.msra.mxu0 %v1796
    %1838 = vmatprep.subr.mxu0 0.0
    %1839 = vmatpush1.msra.mxu0 %v1795
    %1840 = vmatprep.subr.mxu0 0.0
    %1841 = vmatpush1.msra.mxu0 %v1794
    %1842 = vmatprep.subr.mxu0 0.0
    %1843 = vmatpush2.msra.mxu0 0.0
    %1844 = vmatprep.subr.mxu0 0.0
    %1845 = vmatpush2.msra.mxu0 0.0
    %1846 = vmatprep.subr.mxu0 0.0
    %1847 = vmatpush2.msra.mxu0 0.0
    %1848 = vmatprep.subr.mxu0 0.0
    %1849 = vmatpush2.msra.mxu0 0.0
    %1850 = vmatprep.subr.mxu0 0.0
    %1851 = vmatpush2.msra.mxu0 0.0
    %1852 = vmatprep.subr.mxu0 0.0
    %1853 = vmatpush2.msra.mxu0 0.0
    %1854 = vmatprep.subr.mxu0 0.0
    %1855 = vmatpush2.msra.mxu0 0.0
    %1856 = vmatprep.subr.mxu0 0.0
    %1857 = vmatpush2.msra.mxu0 0.0
    %1858 = vmatprep.subr.mxu0 0.0
    %1859 = vmatpush2.msra.mxu0 0.0
    %1860 = vmatprep.subr.mxu0 0.0
    %1861 = vmatpush2.msra.mxu0 0.0
    %1862 = vmatprep.subr.mxu0 0.0
    %1863 = vmatpush2.msra.mxu0 0.0
    %1864 = vmatprep.subr.mxu0 0.0
    %1865 = vmatpush2.msra.mxu0 0.0
    %1866 = vmatprep.subr.mxu0 0.0
    %1867 = vmatpush2.msra.mxu0 0.0
    %1868 = vmatprep.subr.mxu0 0.0
    %1869 = vmatpush2.msra.mxu0 0.0
    %1870 = vmatprep.subr.mxu0 0.0
    %1871 = vmatpush2.msra.mxu0 0.0
    %1872 = vmatprep.subr.mxu0 0.0
    %1873 = vmatpush2.msra.mxu0 0.0
    %1874 = vmatprep.mubr.f32.mxu0 0.0
    %1875 = vmatmul.mubr.f32.gmra.mxu0 %v1792
    %v1876 = vpop.f32.mrf.mxu0
    %v1877 = vadd.f32 0.0, %v1876
    %v1878 = vpop.f32.mrf.mxu0
    %1879 = vmatprep.mubr.f32.mxu0 0.0
    %1880 = vmatmul.mubr.f32.gmra.mxu0 %v1793
    %v1881 = vpop.f32.mrf.mxu0
    %v1882 = vadd.f32 0.0, %v1881
    %v1883 = vpop.f32.mrf.mxu0
    %1884 = vdwg.mxu0
    %v1885 = vld [vmem:[%s11] sm:$0xff]
    %v1886 = vld [vmem:[%s11 + $0x8] sm:$0xff]
    %v1887 = vld [vmem:[%s11 + $0x10] sm:$0xff]
    %v1888 = vld [vmem:[%s11 + $0x18] sm:$0xff]
    %v1889 = vld [vmem:[%s11 + $0x20] sm:$0xff]
    %v1890 = vld [vmem:[%s11 + $0x28] sm:$0xff]
    %v1891 = vld [vmem:[%s11 + $0x30] sm:$0xff]
    %v1892 = vld [vmem:[%s11 + $0x38] sm:$0xff]
    %v1893 = vld [vmem:[%s12] sm:$0x1]
    %v1895 = vlaneseq
    %v1896 = vshrl.u32 %v1895, 7
    %v1897 = vsub.s32 0, %v1896
    %v1898 = vrot.slane %v1893, %v1897
    %v1901 = vsel %vm1095, %v1877, 0
    %v1904 = vsel %vm1095, %v1882, 0
    %1906 = vmatprep.subr.mxu0 0.0
    %1907 = vmatpush1.msra.mxu0 0.0
    %1908 = vmatprep.subr.mxu0 0.0
    %1909 = vmatpush1.msra.mxu0 0.0
    %1910 = vmatprep.subr.mxu0 0.0
    %1911 = vmatpush1.msra.mxu0 0.0
    %1912 = vmatprep.subr.mxu0 0.0
    %1913 = vmatpush1.msra.mxu0 0.0
    %1914 = vmatprep.subr.mxu0 0.0
    %1915 = vmatpush1.msra.mxu0 0.0
    %1916 = vmatprep.subr.mxu0 0.0
    %1917 = vmatpush1.msra.mxu0 0.0
    %1918 = vmatprep.subr.mxu0 0.0
    %1919 = vmatpush1.msra.mxu0 0.0
    %1920 = vmatprep.subr.mxu0 0.0
    %1921 = vmatpush1.msra.mxu0 0.0
    %1922 = vmatprep.subr.mxu0 0.0
    %1923 = vmatpush1.msra.mxu0 %v1892
    %1924 = vmatprep.subr.mxu0 0.0
    %1925 = vmatpush1.msra.mxu0 %v1891
    %1926 = vmatprep.subr.mxu0 0.0
    %1927 = vmatpush1.msra.mxu0 %v1890
    %1928 = vmatprep.subr.mxu0 0.0
    %1929 = vmatpush1.msra.mxu0 %v1889
    %1930 = vmatprep.subr.mxu0 0.0
    %1931 = vmatpush1.msra.mxu0 %v1888
    %1932 = vmatprep.subr.mxu0 0.0
    %1933 = vmatpush1.msra.mxu0 %v1887
    %1934 = vmatprep.subr.mxu0 0.0
    %1935 = vmatpush1.msra.mxu0 %v1886
    %1936 = vmatprep.subr.mxu0 0.0
    %1937 = vmatpush1.msra.mxu0 %v1885
    %1938 = vmatprep.subr.mxu0 0.0
    %1939 = vmatpush2.msra.mxu0 0.0
    %1940 = vmatprep.subr.mxu0 0.0
    %1941 = vmatpush2.msra.mxu0 0.0
    %1942 = vmatprep.subr.mxu0 0.0
    %1943 = vmatpush2.msra.mxu0 0.0
    %1944 = vmatprep.subr.mxu0 0.0
    %1945 = vmatpush2.msra.mxu0 0.0
    %1946 = vmatprep.subr.mxu0 0.0
    %1947 = vmatpush2.msra.mxu0 0.0
    %1948 = vmatprep.subr.mxu0 0.0
    %1949 = vmatpush2.msra.mxu0 0.0
    %1950 = vmatprep.subr.mxu0 0.0
    %1951 = vmatpush2.msra.mxu0 0.0
    %1952 = vmatprep.subr.mxu0 0.0
    %1953 = vmatpush2.msra.mxu0 0.0
    %1954 = vmatprep.subr.mxu0 0.0
    %1955 = vmatpush2.msra.mxu0 0.0
    %1956 = vmatprep.subr.mxu0 0.0
    %1957 = vmatpush2.msra.mxu0 0.0
    %1958 = vmatprep.subr.mxu0 0.0
    %1959 = vmatpush2.msra.mxu0 0.0
    %1960 = vmatprep.subr.mxu0 0.0
    %1961 = vmatpush2.msra.mxu0 0.0
    %1962 = vmatprep.subr.mxu0 0.0
    %1963 = vmatpush2.msra.mxu0 0.0
    %1964 = vmatprep.subr.mxu0 0.0
    %1965 = vmatpush2.msra.mxu0 0.0
    %1966 = vmatprep.subr.mxu0 0.0
    %1967 = vmatpush2.msra.mxu0 0.0
    %1968 = vmatprep.subr.mxu0 0.0
    %1969 = vmatpush2.msra.mxu0 0.0
    %1970 = vmatprep.mubr.f32.mxu0 0.0
    %1971 = vmatmul.mubr.f32.gmra.mxu0 %v1901
    %v1972 = vpop.f32.mrf.mxu0
    %v1973 = vadd.f32 %v1898, %v1972
    %v1974 = vpop.f32.mrf.mxu0
    %1975 = vmatprep.mubr.f32.mxu0 0.0
    %1976 = vmatmul.mubr.f32.gmra.mxu0 %v1904
    %v1977 = vpop.f32.mrf.mxu0
    %v1978 = vadd.f32 %v1898, %v1977
    %v1979 = vpop.f32.mrf.mxu0
    %1980 = vdwg.mxu0
    %1981 = vst.msk [vmem:[#allocation2] sm:$0xff] %vm59, %v1973
    %1982 = vst.msk [vmem:[#allocation2 + $0x8] sm:$0xff] %vm59, %v1978
    // Predicated region
    $region54: #{tpu_custom_call.1} parent=1 // pred_check
      _
    $region55: #{tpu_custom_call.1} parent=1 // pred_check_branch
      %1984 = sbr.rel (0) target = $region57
    $region56: #{tpu_custom_call.1} parent=1 // pred_region
      %s1986 = ssub.s32 256, 256
      %1987 = vsyncadd [#allocation3], %s1986
      %s1988 = sshll.u32 [#allocation2], 4
      %s1989 = int_to_ptr.vmem [resolvable:$true] %s1988
      %1994 = dma.vmem_to_hbm [thread:$0]  %s1989, 256, %s13, [#allocation3], 128, 128, 8
    $region57: #{tpu_custom_call.1} parent=1 // pred_fallthru
      _
    // Predicated region
    $region58: #{tpu_custom_call.1} parent=1 // pred_check
      _
    $region59: #{tpu_custom_call.1} parent=1 // pred_check_branch
      %1996 = sbr.rel (0) target = $region61
    $region60: #{tpu_custom_call.1} parent=1 // pred_region
      %1997 = dma.done [#allocation3], 256
    $region61: #{tpu_custom_call.1} parent=1 // pred_fallthru
      _
    %1998 = vsyncpa [#allocation3], 1

</llo_original>
